<compile_context>
chip_gen: v6e
topology: v6e:2x2x1
jax: 0.10.0
libtpu: 0.0.40
codegen_flags: <defaults>
</compile_context>

<pallas_src>
import jax
import jax.numpy as jnp
from jax.experimental import pallas as pl
from jax.experimental.pallas import tpu as pltpu


def _round_up(x, m):
    return ((x + m - 1) // m) * m


def _pick_graphs_per_block(B, TN, dp, hpd, dop):
    """Graphs stacked per grid step, bounded by VMEM budget + MXU M target."""
    per_graph = TN * (
        2 * 2 * dp            # node block, bf16, double-buffered
        + 2 * 4 * dop         # output block, f32, double-buffered
        + 4 * (hpd + dop) * 3 # in-kernel f32 temporaries (headroom)
    )
    resident = 2 * (dp * hpd + hpd * dop) + 4 * 8 * (hpd + dop)
    budget = 40 * 1024 * 1024 - resident          # safe for v7x's 64 MiB VMEM
    g_vmem = max(1, budget // max(per_graph, 1))
    g_mxu = max(1, 512 // TN)                     # stacked M ~= 512 rows
    G = int(max(1, min(B, g_vmem, g_mxu)))
    if B >= 2:
        G = min(G, (B + 1) // 2)                  # keep >=2 grid steps (v7x: 2 TCs)
    return G


def _apply_node_func_kernel(
    cnt_ref,          # [G, 8, 128] int32 : per-graph node count, broadcast
    hp_ref,           # [G, TN, dp]  bf16 : packed (zero-padded) node features
    w1_ref,           # [dp, hpd]    bf16 : Linear1 weight (resident)
    np1_ref,          # [8, hpd]     f32  : rows = b1, gamma1, beta1, mean_scale1
    w2_ref,           # [hpd, dop]   bf16 : Linear2 weight (resident)
    np2_ref,          # [8, dop]     f32  : rows = b2, gamma2, beta2, mean_scale2
    out_ref,          # [G, TN, dop] f32
):
    G, TN, dp = hp_ref.shape
    hpd = w1_ref.shape[1]
    dop = w2_ref.shape[1]
    f32 = jnp.float32

    # ---- per-graph scalars on the vector path ----
    cnt = cnt_ref[...][:, 0:1, 0:1]                         # [G,1,1] int32
    inv_cnt = 1.0 / jnp.maximum(cnt, 1).astype(f32)         # [G,1,1] f32
    row_ids = jax.lax.broadcasted_iota(jnp.int32, (1, TN, 1), 1)
    mask = (row_ids < cnt).astype(f32)                      # [G,TN,1] valid rows

    # ---- merged bias / GraphNorm parameter tables ----
    np1 = np1_ref[...]
    b1 = np1[0:1, :].reshape(1, 1, hpd)
    g1w = np1[1:2, :].reshape(1, 1, hpd)
    g1b = np1[2:3, :].reshape(1, 1, hpd)
    g1m = np1[3:4, :].reshape(1, 1, hpd)
    np2 = np2_ref[...]
    b2 = np2[0:1, :].reshape(1, 1, dop)
    g2w = np2[1:2, :].reshape(1, 1, dop)
    g2b = np2[2:3, :].reshape(1, 1, dop)
    g2m = np2[3:4, :].reshape(1, 1, dop)

    # ---- Linear 1 (bf16 operands, f32 MXU accumulation) ----
    h2 = hp_ref[...].reshape(G * TN, dp)
    z1 = jnp.dot(h2, w1_ref[...], preferred_element_type=f32).reshape(G, TN, hpd)

    # ---- GraphNorm 1 (stats in f32) ----
    # Padded rows of hp are exactly zero => sum(z1) over all TN rows equals the
    # sum over valid rows; mean(h@w1 + b1) = sum(z1)*inv_cnt + b1 (no mask mul).
    mean1 = jnp.sum(z1, axis=1, keepdims=True) * inv_cnt + b1
    x1 = z1 + b1
    sub1 = x1 - mean1 * g1m
    s1m = sub1 * mask
    var1 = jnp.sum(s1m * s1m, axis=1, keepdims=True) * inv_cnt
    scale1 = g1w * jax.lax.rsqrt(var1 + 1e-6)               # EUP rsqrt, gamma folded
    y1 = jnp.maximum(sub1 * scale1 + g1b, 0.0)              # ReLU

    # ---- Linear 2 (cast activation at the matmul boundary) ----
    y2 = y1.astype(jnp.bfloat16).reshape(G * TN, hpd)
    z2 = jnp.dot(y2, w2_ref[...], preferred_element_type=f32).reshape(G, TN, dop)
    x2 = z2 + b2

    # ---- GraphNorm 2 + ReLU (y1's padded rows are non-zero -> keep the mask) ----
    mean2 = jnp.sum(x2 * mask, axis=1, keepdims=True) * inv_cnt
    sub2 = x2 - mean2 * g2m
    s2m = sub2 * mask
    var2 = jnp.sum(s2m * s2m, axis=1, keepdims=True) * inv_cnt
    scale2 = g2w * jax.lax.rsqrt(var2 + 1e-6)
    out_ref[...] = jnp.maximum(sub2 * scale2 + g2b, 0.0)


def apply_node_func(h, batch_num_nodes, params):
    """h: [N, Din] f32.  batch_num_nodes: python list of per-graph node counts."""
    h = jnp.asarray(h, jnp.float32)
    N, din = h.shape
    counts_list = [int(c) for c in batch_num_nodes]
    B = len(counts_list)
    counts = jnp.asarray(counts_list, dtype=jnp.int32)

    hidden = params["w1"].shape[1]
    dout = params["w2"].shape[1]

    LANE, SUB = 128, 8
    dp = _round_up(din, LANE)
    hpd = _round_up(hidden, LANE)
    dop = _round_up(dout, LANE)
    TN = max(_round_up(max(counts_list), SUB), SUB)

    G = _pick_graphs_per_block(B, TN, dp, hpd, dop)
    Bp = _round_up(B, G)
    nsteps = Bp // G

    # per-graph counts, padded batch, broadcast into an (8,128)-tileable block
    counts_p = jnp.zeros((Bp,), jnp.int32).at[:B].set(counts)
    cntb = jnp.broadcast_to(counts_p[:, None, None], (Bp, 8, 128)).astype(jnp.int32)

    # pack flat nodes into [Bp, TN, dp] bf16 (padded rows are exactly zero)
    offsets = jnp.concatenate(
        [jnp.zeros((1,), jnp.int32), jnp.cumsum(counts)[:-1].astype(jnp.int32)])
    gid = jnp.repeat(jnp.arange(B, dtype=jnp.int32), counts, total_repeat_length=N)
    pos = jnp.arange(N, dtype=jnp.int32) - offsets[gid]
    h_pad = jnp.pad(h, ((0, 0), (0, dp - din))).astype(jnp.bfloat16)
    hp = jnp.zeros((Bp, TN, dp), jnp.bfloat16).at[gid, pos].set(h_pad)

    def pad2(a, r, c, dt):
        a = jnp.asarray(a, jnp.float32)
        a = jnp.pad(a, ((0, r - a.shape[0]), (0, c - a.shape[1])))
        return a.astype(dt)

    w1 = pad2(params["w1"], dp, hpd, jnp.bfloat16)
    w2 = pad2(params["w2"], hpd, dop, jnp.bfloat16)
    # merged [8, D] f32 parameter tables: rows = bias, gamma, beta, mean_scale
    np1 = jnp.concatenate(
        [pad2(params["b1"], 1, hpd, jnp.float32),
         pad2(params["g1_w"], 1, hpd, jnp.float32),
         pad2(params["g1_b"], 1, hpd, jnp.float32),
         pad2(params["g1_ms"], 1, hpd, jnp.float32),
         jnp.zeros((4, hpd), jnp.float32)], axis=0)
    np2 = jnp.concatenate(
        [pad2(params["b2"], 1, dop, jnp.float32),
         pad2(params["g2_w"], 1, dop, jnp.float32),
         pad2(params["g2_b"], 1, dop, jnp.float32),
         pad2(params["g2_ms"], 1, dop, jnp.float32),
         jnp.zeros((4, dop), jnp.float32)], axis=0)

    def run(single_buffer_consts):
        cmode = {"pipeline_mode": pl.Buffered(1)} if single_buffer_consts else {}
        blk = lambda i: (i, 0, 0)
        c2 = lambda i: (0, 0)
        in_specs = [
            pl.BlockSpec((G, 8, 128), blk),            # counts (streamed, tiny)
            pl.BlockSpec((G, TN, dp), blk),            # node features (streamed)
            pl.BlockSpec((dp, hpd), c2, **cmode),      # w1 (resident)
            pl.BlockSpec((8, hpd), c2, **cmode),       # bias/norm params (hidden)
            pl.BlockSpec((hpd, dop), c2, **cmode),     # w2 (resident)
            pl.BlockSpec((8, dop), c2, **cmode),       # bias/norm params (out)
        ]
        out_specs = pl.BlockSpec((G, TN, dop), blk)
        return pl.pallas_call(
            _apply_node_func_kernel,
            out_shape=jax.ShapeDtypeStruct((Bp, TN, dop), jnp.float32),
            grid=(nsteps,),
            in_specs=in_specs,
            out_specs=out_specs,
            compiler_params=pltpu.CompilerParams(
                dimension_semantics=("parallel",),
                vmem_limit_bytes=48 * 1024 * 1024,
            ),
        )(cntb, hp, w1, np1, w2, np2)

    try:
        outp = run(True)
    except Exception:
        # Fallback for jax versions without BlockSpec(pipeline_mode=...):
        # identical kernel, default double-buffered resident weights.
        outp = run(False)

    # Gather back to the flat [N, Dout] node layout (drop padded rows/cols).
    return outp[gid, pos, :dout]


def _reference(h, batch_num_nodes, params):
    """Pure-JAX reference mirroring the PyTorch forward; matmul operands are
    cast to bf16 exactly like the kernel (GraphNorm stats stay f32)."""
    counts = jnp.asarray(batch_num_nodes, dtype=jnp.int32)
    B = counts.shape[0]
    N = h.shape[0]
    gid = jnp.repeat(jnp.arange(B), counts, total_repeat_length=N)
    bf = jnp.bfloat16

    def gnorm(x, gamma, beta, mscale):
        mean = jax.ops.segment_sum(x, gid, B) / counts[:, None]
        sub = x - mean[gid] * mscale
        var = jax.ops.segment_sum(sub * sub, gid, B) / counts[:, None]
        std = jnp.sqrt(var + 1e-6)
        return gamma * sub / std[gid] + beta

    z = jnp.dot(h.astype(bf), params["w1"].astype(bf),
                preferred_element_type=jnp.float32) + params["b1"]
    z = jnp.maximum(gnorm(z, params["g1_w"], params["g1_b"], params["g1_ms"]), 0.0)
    z = jnp.dot(z.astype(bf), params["w2"].astype(bf),
                preferred_element_type=jnp.float32) + params["b2"]
    z = gnorm(z, params["g2_w"], params["g2_b"], params["g2_ms"])
    return jnp.maximum(z, 0.0)


if __name__ == "__main__":
    key = jax.random.PRNGKey(0)
    k_h, k_w1, k_b1, k_w2, k_b2 = jax.random.split(key, 5)

    # small shapes: 2 graphs (6 and 10 nodes), input/hidden/output dim = 32
    N, B = 16, 2
    din, hidden, dout = 32, 32, 32
    batch_num_nodes = [6, 10]

    h = jax.random.normal(k_h, (N, din), dtype=jnp.float32)

    # deterministic parameter init (GraphNorm params at their PyTorch defaults)
    params = {
        "w1": jax.random.normal(k_w1, (din, hidden), dtype=jnp.float32) * 0.1,
        "b1": jax.random.normal(k_b1, (1, hidden), dtype=jnp.float32) * 0.1,
        "g1_w": jnp.ones((1, hidden), jnp.float32),
        "g1_b": jnp.zeros((1, hidden), jnp.float32),
        "g1_ms": jnp.ones((1, hidden), jnp.float32),
        "w2": jax.random.normal(k_w2, (hidden, dout), dtype=jnp.float32) * 0.1,
        "b2": jax.random.normal(k_b2, (1, dout), dtype=jnp.float32) * 0.1,
        "g2_w": jnp.ones((1, dout), jnp.float32),
        "g2_b": jnp.zeros((1, dout), jnp.float32),
        "g2_ms": jnp.ones((1, dout), jnp.float32),
    }

    out = apply_node_func(h, batch_num_nodes, params)
    out = jax.block_until_ready(out)

    ref = _reference(h, batch_num_nodes, params)
    assert out.shape == (N, dout)
    err = float(jnp.max(jnp.abs(out - ref)))
    # bf16 matmul operands (kernel and reference match); f32 stats math.
    assert jnp.allclose(out, ref, atol=5e-3, rtol=5e-3), err

    print("KERNEL_OK")
</pallas_src>

<mosaic_0001>
module attributes {stable_mosaic.version = 11 : i64} {
  func.func @_apply_node_func_kernel(%arg0: i32, %arg1: memref<1x8x128xi32, #tpu.memory_space<vmem>>, %arg2: memref<1x16x128xbf16, #tpu.memory_space<vmem>>, %arg3: memref<128x128xbf16, #tpu.memory_space<vmem>>, %arg4: memref<8x128xf32, #tpu.memory_space<vmem>>, %arg5: memref<128x128xbf16, #tpu.memory_space<vmem>>, %arg6: memref<8x128xf32, #tpu.memory_space<vmem>>, %arg7: memref<1x16x128xf32, #tpu.memory_space<vmem>>) attributes {dimension_semantics = [#tpu.dimension_semantics<parallel>], iteration_bounds = array<i64: 2>, scalar_prefetch = 0 : i64, scratch_operands = 0 : i64, tpu.core_type = #tpu.core_type<tc>, window_params = [{transform_indices = @transform_0, window_bounds = array<i64: 1, 8, 128>}, {transform_indices = @transform_1, window_bounds = array<i64: 1, 16, 128>}, {pipeline_mode = #tpu.pipeline_mode<synchronous>, transform_indices = @transform_2, window_bounds = array<i64: 128, 128>}, {pipeline_mode = #tpu.pipeline_mode<synchronous>, transform_indices = @transform_3, window_bounds = array<i64: 8, 128>}, {pipeline_mode = #tpu.pipeline_mode<synchronous>, transform_indices = @transform_4, window_bounds = array<i64: 128, 128>}, {pipeline_mode = #tpu.pipeline_mode<synchronous>, transform_indices = @transform_5, window_bounds = array<i64: 8, 128>}, {transform_indices = @transform_6, window_bounds = array<i64: 1, 16, 128>}]} {
    %c0 = arith.constant 0 : index
    %c0_0 = arith.constant 0 : index
    %c0_1 = arith.constant 0 : index
    %0 = vector.load %arg1[%c0, %c0_0, %c0_1] : memref<1x8x128xi32, #tpu.memory_space<vmem>>, vector<1x8x128xi32>
    %1 = vector.extract_strided_slice %0 {offsets = [0, 0, 0], sizes = [1, 1, 1], strides = [1, 1, 1]} : vector<1x8x128xi32> to vector<1x1x1xi32>
    %c1_i32 = arith.constant 1 : i32
    %2 = vector.broadcast %c1_i32 : i32 to vector<1x1x1xi32>
    %3 = arith.maxsi %1, %2 : vector<1x1x1xi32>
    %4 = arith.sitofp %3 : vector<1x1x1xi32> to vector<1x1x1xf32>
    %cst = arith.constant 1.000000e+00 : f32
    %5 = vector.broadcast %cst : f32 to vector<1x1x1xf32>
    %6 = arith.divf %5, %4 : vector<1x1x1xf32>
    %7 = tpu.iota {dimensions = array<i32: 1>} : vector<1x16x1xi32>
    %8 = vector.broadcast %1 : vector<1x1x1xi32> to vector<1x16x1xi32>
    %9 = arith.cmpi slt, %7, %8 : vector<1x16x1xi32>
    %10 = arith.extui %9 : vector<1x16x1xi1> to vector<1x16x1xi32>
    %11 = arith.sitofp %10 : vector<1x16x1xi32> to vector<1x16x1xf32>
    %c0_2 = arith.constant 0 : index
    %c0_3 = arith.constant 0 : index
    %12 = vector.load %arg4[%c0_2, %c0_3] : memref<8x128xf32, #tpu.memory_space<vmem>>, vector<8x128xf32>
    %13 = vector.extract_strided_slice %12 {offsets = [0, 0], sizes = [1, 128], strides = [1, 1]} : vector<8x128xf32> to vector<1x128xf32>
    %14 = vector.shape_cast %13 : vector<1x128xf32> to vector<1x1x128xf32>
    %15 = vector.extract_strided_slice %12 {offsets = [1, 0], sizes = [1, 128], strides = [1, 1]} : vector<8x128xf32> to vector<1x128xf32>
    %16 = vector.shape_cast %15 : vector<1x128xf32> to vector<1x1x128xf32>
    %17 = vector.extract_strided_slice %12 {offsets = [2, 0], sizes = [1, 128], strides = [1, 1]} : vector<8x128xf32> to vector<1x128xf32>
    %18 = vector.shape_cast %17 : vector<1x128xf32> to vector<1x1x128xf32>
    %19 = vector.extract_strided_slice %12 {offsets = [3, 0], sizes = [1, 128], strides = [1, 1]} : vector<8x128xf32> to vector<1x128xf32>
    %20 = vector.shape_cast %19 : vector<1x128xf32> to vector<1x1x128xf32>
    %c0_4 = arith.constant 0 : index
    %c0_5 = arith.constant 0 : index
    %21 = vector.load %arg6[%c0_4, %c0_5] : memref<8x128xf32, #tpu.memory_space<vmem>>, vector<8x128xf32>
    %22 = vector.extract_strided_slice %21 {offsets = [0, 0], sizes = [1, 128], strides = [1, 1]} : vector<8x128xf32> to vector<1x128xf32>
    %23 = vector.shape_cast %22 : vector<1x128xf32> to vector<1x1x128xf32>
    %24 = vector.extract_strided_slice %21 {offsets = [1, 0], sizes = [1, 128], strides = [1, 1]} : vector<8x128xf32> to vector<1x128xf32>
    %25 = vector.shape_cast %24 : vector<1x128xf32> to vector<1x1x128xf32>
    %26 = vector.extract_strided_slice %21 {offsets = [2, 0], sizes = [1, 128], strides = [1, 1]} : vector<8x128xf32> to vector<1x128xf32>
    %27 = vector.shape_cast %26 : vector<1x128xf32> to vector<1x1x128xf32>
    %28 = vector.extract_strided_slice %21 {offsets = [3, 0], sizes = [1, 128], strides = [1, 1]} : vector<8x128xf32> to vector<1x128xf32>
    %29 = vector.shape_cast %28 : vector<1x128xf32> to vector<1x1x128xf32>
    %c0_6 = arith.constant 0 : index
    %c0_7 = arith.constant 0 : index
    %c0_8 = arith.constant 0 : index
    %30 = vector.load %arg2[%c0_6, %c0_7, %c0_8] : memref<1x16x128xbf16, #tpu.memory_space<vmem>>, vector<1x16x128xbf16>
    %31 = vector.shape_cast %30 : vector<1x16x128xbf16> to vector<16x128xbf16>
    %c0_9 = arith.constant 0 : index
    %c0_10 = arith.constant 0 : index
    %32 = vector.load %arg3[%c0_9, %c0_10] : memref<128x128xbf16, #tpu.memory_space<vmem>>, vector<128x128xbf16>
    %cst_11 = arith.constant dense<0.000000e+00> : vector<16x128xf32>
    %33 = tpu.matmul %31, %32, %cst_11 {dimension_numbers = #tpu.dot_dimension_numbers<[1], [0], [0], [1], [0, 0, 1, 1], [], []>} : vector<16x128xbf16>, vector<128x128xbf16>, vector<16x128xf32> -> vector<16x128xf32>
    %34 = vector.shape_cast %33 : vector<16x128xf32> to vector<1x16x128xf32>
    %cst_12 = arith.constant dense<0.000000e+00> : vector<1x128xf32>
    %35 = vector.multi_reduction <add>, %34, %cst_12 [1] : vector<1x16x128xf32> to vector<1x128xf32>
    %36 = vector.shape_cast %35 : vector<1x128xf32> to vector<1x1x128xf32>
    %37 = vector.broadcast %6 : vector<1x1x1xf32> to vector<1x1x128xf32>
    %38 = arith.mulf %36, %37 : vector<1x1x128xf32>
    %39 = arith.addf %38, %14 : vector<1x1x128xf32>
    %40 = vector.broadcast %14 : vector<1x1x128xf32> to vector<1x16x128xf32>
    %41 = arith.addf %34, %40 : vector<1x16x128xf32>
    %42 = arith.mulf %39, %20 : vector<1x1x128xf32>
    %43 = vector.broadcast %42 : vector<1x1x128xf32> to vector<1x16x128xf32>
    %44 = arith.subf %41, %43 : vector<1x16x128xf32>
    %45 = vector.broadcast %11 : vector<1x16x1xf32> to vector<1x16x128xf32>
    %46 = arith.mulf %44, %45 : vector<1x16x128xf32>
    %47 = arith.mulf %46, %46 : vector<1x16x128xf32>
    %cst_13 = arith.constant dense<0.000000e+00> : vector<1x128xf32>
    %48 = vector.multi_reduction <add>, %47, %cst_13 [1] : vector<1x16x128xf32> to vector<1x128xf32>
    %49 = vector.shape_cast %48 : vector<1x128xf32> to vector<1x1x128xf32>
    %50 = vector.broadcast %6 : vector<1x1x1xf32> to vector<1x1x128xf32>
    %51 = arith.mulf %49, %50 : vector<1x1x128xf32>
    %cst_14 = arith.constant 9.99999997E-7 : f32
    %52 = vector.broadcast %cst_14 : f32 to vector<1x1x128xf32>
    %53 = arith.addf %51, %52 : vector<1x1x128xf32>
    %54 = math.rsqrt %53 : vector<1x1x128xf32>
    %55 = arith.mulf %16, %54 : vector<1x1x128xf32>
    %56 = vector.broadcast %55 : vector<1x1x128xf32> to vector<1x16x128xf32>
    %57 = arith.mulf %44, %56 : vector<1x16x128xf32>
    %58 = vector.broadcast %18 : vector<1x1x128xf32> to vector<1x16x128xf32>
    %59 = arith.addf %57, %58 : vector<1x16x128xf32>
    %cst_15 = arith.constant 0.000000e+00 : f32
    %60 = vector.broadcast %cst_15 : f32 to vector<1x16x128xf32>
    %61 = arith.maximumf %59, %60 : vector<1x16x128xf32>
    %62 = arith.truncf %61 : vector<1x16x128xf32> to vector<1x16x128xbf16>
    %63 = vector.shape_cast %62 : vector<1x16x128xbf16> to vector<16x128xbf16>
    %c0_16 = arith.constant 0 : index
    %c0_17 = arith.constant 0 : index
    %64 = vector.load %arg5[%c0_16, %c0_17] : memref<128x128xbf16, #tpu.memory_space<vmem>>, vector<128x128xbf16>
    %cst_18 = arith.constant dense<0.000000e+00> : vector<16x128xf32>
    %65 = tpu.matmul %63, %64, %cst_18 {dimension_numbers = #tpu.dot_dimension_numbers<[1], [0], [0], [1], [0, 0, 1, 1], [], []>} : vector<16x128xbf16>, vector<128x128xbf16>, vector<16x128xf32> -> vector<16x128xf32>
    %66 = vector.shape_cast %65 : vector<16x128xf32> to vector<1x16x128xf32>
    %67 = vector.broadcast %23 : vector<1x1x128xf32> to vector<1x16x128xf32>
    %68 = arith.addf %66, %67 : vector<1x16x128xf32>
    %69 = vector.broadcast %11 : vector<1x16x1xf32> to vector<1x16x128xf32>
    %70 = arith.mulf %68, %69 : vector<1x16x128xf32>
    %cst_19 = arith.constant dense<0.000000e+00> : vector<1x128xf32>
    %71 = vector.multi_reduction <add>, %70, %cst_19 [1] : vector<1x16x128xf32> to vector<1x128xf32>
    %72 = vector.shape_cast %71 : vector<1x128xf32> to vector<1x1x128xf32>
    %73 = vector.broadcast %6 : vector<1x1x1xf32> to vector<1x1x128xf32>
    %74 = arith.mulf %72, %73 : vector<1x1x128xf32>
    %75 = arith.mulf %74, %29 : vector<1x1x128xf32>
    %76 = vector.broadcast %75 : vector<1x1x128xf32> to vector<1x16x128xf32>
    %77 = arith.subf %68, %76 : vector<1x16x128xf32>
    %78 = vector.broadcast %11 : vector<1x16x1xf32> to vector<1x16x128xf32>
    %79 = arith.mulf %77, %78 : vector<1x16x128xf32>
    %80 = arith.mulf %79, %79 : vector<1x16x128xf32>
    %cst_20 = arith.constant dense<0.000000e+00> : vector<1x128xf32>
    %81 = vector.multi_reduction <add>, %80, %cst_20 [1] : vector<1x16x128xf32> to vector<1x128xf32>
    %82 = vector.shape_cast %81 : vector<1x128xf32> to vector<1x1x128xf32>
    %83 = vector.broadcast %6 : vector<1x1x1xf32> to vector<1x1x128xf32>
    %84 = arith.mulf %82, %83 : vector<1x1x128xf32>
    %cst_21 = arith.constant 9.99999997E-7 : f32
    %85 = vector.broadcast %cst_21 : f32 to vector<1x1x128xf32>
    %86 = arith.addf %84, %85 : vector<1x1x128xf32>
    %87 = math.rsqrt %86 : vector<1x1x128xf32>
    %88 = arith.mulf %25, %87 : vector<1x1x128xf32>
    %89 = vector.broadcast %88 : vector<1x1x128xf32> to vector<1x16x128xf32>
    %90 = arith.mulf %77, %89 : vector<1x16x128xf32>
    %91 = vector.broadcast %27 : vector<1x1x128xf32> to vector<1x16x128xf32>
    %92 = arith.addf %90, %91 : vector<1x16x128xf32>
    %cst_22 = arith.constant 0.000000e+00 : f32
    %93 = vector.broadcast %cst_22 : f32 to vector<1x16x128xf32>
    %94 = arith.maximumf %92, %93 : vector<1x16x128xf32>
    %c0_23 = arith.constant 0 : index
    %c0_24 = arith.constant 0 : index
    %c0_25 = arith.constant 0 : index
    %95 = vector.load %arg7[%c0_23, %c0_24, %c0_25] : memref<1x16x128xf32, #tpu.memory_space<vmem>>, vector<1x16x128xf32>
    tpu.vector_store %arg7[%c0_23, %c0_24, %c0_25], %94 {strides = array<i32>} : memref<1x16x128xf32, #tpu.memory_space<vmem>>, vector<1x16x128xf32>,
    return
  }
  func.func @transform_0(%arg0: i32) -> (i32, i32, i32) {
    %c0_i32 = arith.constant 0 : i32
    %c0_i32_0 = arith.constant 0 : i32
    %c0_i32_1 = arith.constant 0 : i32
    return %arg0, %c0_i32, %c0_i32_0 : i32, i32, i32
  }
  func.func @transform_1(%arg0: i32) -> (i32, i32, i32) {
    %c0_i32 = arith.constant 0 : i32
    %c0_i32_0 = arith.constant 0 : i32
    %c0_i32_1 = arith.constant 0 : i32
    return %arg0, %c0_i32, %c0_i32_0 : i32, i32, i32
  }
  func.func @transform_2(%arg0: i32) -> (i32, i32) {
    %c0_i32 = arith.constant 0 : i32
    %c0_i32_0 = arith.constant 0 : i32
    %c0_i32_1 = arith.constant 0 : i32
    return %c0_i32, %c0_i32_0 : i32, i32
  }
  func.func @transform_3(%arg0: i32) -> (i32, i32) {
    %c0_i32 = arith.constant 0 : i32
    %c0_i32_0 = arith.constant 0 : i32
    %c0_i32_1 = arith.constant 0 : i32
    return %c0_i32, %c0_i32_0 : i32, i32
  }
  func.func @transform_4(%arg0: i32) -> (i32, i32) {
    %c0_i32 = arith.constant 0 : i32
    %c0_i32_0 = arith.constant 0 : i32
    %c0_i32_1 = arith.constant 0 : i32
    return %c0_i32, %c0_i32_0 : i32, i32
  }
  func.func @transform_5(%arg0: i32) -> (i32, i32) {
    %c0_i32 = arith.constant 0 : i32
    %c0_i32_0 = arith.constant 0 : i32
    %c0_i32_1 = arith.constant 0 : i32
    return %c0_i32, %c0_i32_0 : i32, i32
  }
  func.func @transform_6(%arg0: i32) -> (i32, i32, i32) {
    %c0_i32 = arith.constant 0 : i32
    %c0_i32_0 = arith.constant 0 : i32
    %c0_i32_1 = arith.constant 0 : i32
    return %arg0, %c0_i32, %c0_i32_0 : i32, i32, i32
  }
}

module attributes {stable_mosaic.version = 11 : i64} {
  func.func @_apply_node_func_kernel(%arg0: i32, %arg1: memref<1x8x128xi32, #tpu.memory_space<vmem>>, %arg2: memref<1x16x128xbf16, #tpu.memory_space<vmem>>, %arg3: memref<128x128xbf16, #tpu.memory_space<vmem>>, %arg4: memref<8x128xf32, #tpu.memory_space<vmem>>, %arg5: memref<128x128xbf16, #tpu.memory_space<vmem>>, %arg6: memref<8x128xf32, #tpu.memory_space<vmem>>, %arg7: memref<1x16x128xf32, #tpu.memory_space<vmem>>) attributes {dimension_semantics = [#tpu.dimension_semantics<parallel>], iteration_bounds = array<i64: 2>, scalar_prefetch = 0 : i64, scratch_operands = 0 : i64, tpu.core_type = #tpu.core_type<tc>, window_params = [{transform_indices = @transform_0, window_bounds = array<i64: 1, 8, 128>}, {transform_indices = @transform_1, window_bounds = array<i64: 1, 16, 128>}, {pipeline_mode = #tpu.pipeline_mode<synchronous>, transform_indices = @transform_2, window_bounds = array<i64: 128, 128>}, {pipeline_mode = #tpu.pipeline_mode<synchronous>, transform_indices = @transform_3, window_bounds = array<i64: 8, 128>}, {pipeline_mode = #tpu.pipeline_mode<synchronous>, transform_indices = @transform_4, window_bounds = array<i64: 128, 128>}, {pipeline_mode = #tpu.pipeline_mode<synchronous>, transform_indices = @transform_5, window_bounds = array<i64: 8, 128>}, {transform_indices = @transform_6, window_bounds = array<i64: 1, 16, 128>}]} {
    %c0 = arith.constant 0 : index
    %c0_0 = arith.constant 0 : index
    %c0_1 = arith.constant 0 : index
    %0 = vector.load %arg1[%c0, %c0_0, %c0_1] : memref<1x8x128xi32, #tpu.memory_space<vmem>>, vector<1x8x128xi32>
    %1 = vector.extract_strided_slice %0 {offsets = [0, 0, 0], sizes = [1, 1, 1], strides = [1, 1, 1]} : vector<1x8x128xi32> to vector<1x1x1xi32>
    %c1_i32 = arith.constant 1 : i32
    %2 = vector.broadcast %c1_i32 : i32 to vector<1x1x1xi32>
    %3 = arith.maxsi %1, %2 : vector<1x1x1xi32>
    %4 = arith.sitofp %3 : vector<1x1x1xi32> to vector<1x1x1xf32>
    %cst = arith.constant 1.000000e+00 : f32
    %5 = vector.broadcast %cst : f32 to vector<1x1x1xf32>
    %6 = arith.divf %5, %4 : vector<1x1x1xf32>
    %7 = tpu.iota {dimensions = array<i32: 1>} : vector<1x16x1xi32>
    %8 = vector.broadcast %1 : vector<1x1x1xi32> to vector<1x16x1xi32>
    %9 = arith.cmpi slt, %7, %8 : vector<1x16x1xi32>
    %10 = arith.extui %9 : vector<1x16x1xi1> to vector<1x16x1xi32>
    %11 = arith.sitofp %10 : vector<1x16x1xi32> to vector<1x16x1xf32>
    %c0_2 = arith.constant 0 : index
    %c0_3 = arith.constant 0 : index
    %12 = vector.load %arg4[%c0_2, %c0_3] : memref<8x128xf32, #tpu.memory_space<vmem>>, vector<8x128xf32>
    %13 = vector.extract_strided_slice %12 {offsets = [0, 0], sizes = [1, 128], strides = [1, 1]} : vector<8x128xf32> to vector<1x128xf32>
    %14 = vector.shape_cast %13 : vector<1x128xf32> to vector<1x1x128xf32>
    %15 = vector.extract_strided_slice %12 {offsets = [1, 0], sizes = [1, 128], strides = [1, 1]} : vector<8x128xf32> to vector<1x128xf32>
    %16 = vector.shape_cast %15 : vector<1x128xf32> to vector<1x1x128xf32>
    %17 = vector.extract_strided_slice %12 {offsets = [2, 0], sizes = [1, 128], strides = [1, 1]} : vector<8x128xf32> to vector<1x128xf32>
    %18 = vector.shape_cast %17 : vector<1x128xf32> to vector<1x1x128xf32>
    %19 = vector.extract_strided_slice %12 {offsets = [3, 0], sizes = [1, 128], strides = [1, 1]} : vector<8x128xf32> to vector<1x128xf32>
    %20 = vector.shape_cast %19 : vector<1x128xf32> to vector<1x1x128xf32>
    %c0_4 = arith.constant 0 : index
    %c0_5 = arith.constant 0 : index
    %21 = vector.load %arg6[%c0_4, %c0_5] : memref<8x128xf32, #tpu.memory_space<vmem>>, vector<8x128xf32>
    %22 = vector.extract_strided_slice %21 {offsets = [0, 0], sizes = [1, 128], strides = [1, 1]} : vector<8x128xf32> to vector<1x128xf32>
    %23 = vector.shape_cast %22 : vector<1x128xf32> to vector<1x1x128xf32>
    %24 = vector.extract_strided_slice %21 {offsets = [1, 0], sizes = [1, 128], strides = [1, 1]} : vector<8x128xf32> to vector<1x128xf32>
    %25 = vector.shape_cast %24 : vector<1x128xf32> to vector<1x1x128xf32>
    %26 = vector.extract_strided_slice %21 {offsets = [2, 0], sizes = [1, 128], strides = [1, 1]} : vector<8x128xf32> to vector<1x128xf32>
    %27 = vector.shape_cast %26 : vector<1x128xf32> to vector<1x1x128xf32>
    %28 = vector.extract_strided_slice %21 {offsets = [3, 0], sizes = [1, 128], strides = [1, 1]} : vector<8x128xf32> to vector<1x128xf32>
    %29 = vector.shape_cast %28 : vector<1x128xf32> to vector<1x1x128xf32>
    %c0_6 = arith.constant 0 : index
    %c0_7 = arith.constant 0 : index
    %c0_8 = arith.constant 0 : index
    %30 = vector.load %arg2[%c0_6, %c0_7, %c0_8] : memref<1x16x128xbf16, #tpu.memory_space<vmem>>, vector<1x16x128xbf16>
    %31 = vector.shape_cast %30 : vector<1x16x128xbf16> to vector<16x128xbf16>
    %c0_9 = arith.constant 0 : index
    %c0_10 = arith.constant 0 : index
    %32 = vector.load %arg3[%c0_9, %c0_10] : memref<128x128xbf16, #tpu.memory_space<vmem>>, vector<128x128xbf16>
    %cst_11 = arith.constant dense<0.000000e+00> : vector<16x128xf32>
    %33 = tpu.matmul %31, %32, %cst_11 {dimension_numbers = #tpu.dot_dimension_numbers<[1], [0], [0], [1], [0, 0, 1, 1], [], []>} : vector<16x128xbf16>, vector<128x128xbf16>, vector<16x128xf32> -> vector<16x128xf32>
    %34 = vector.shape_cast %33 : vector<16x128xf32> to vector<1x16x128xf32>
    %cst_12 = arith.constant dense<0.000000e+00> : vector<1x128xf32>
    %35 = vector.multi_reduction <add>, %34, %cst_12 [1] : vector<1x16x128xf32> to vector<1x128xf32>
    %36 = vector.shape_cast %35 : vector<1x128xf32> to vector<1x1x128xf32>
    %37 = vector.broadcast %6 : vector<1x1x1xf32> to vector<1x1x128xf32>
    %38 = arith.mulf %36, %37 : vector<1x1x128xf32>
    %39 = arith.addf %38, %14 : vector<1x1x128xf32>
    %40 = vector.broadcast %14 : vector<1x1x128xf32> to vector<1x16x128xf32>
    %41 = arith.addf %34, %40 : vector<1x16x128xf32>
    %42 = arith.mulf %39, %20 : vector<1x1x128xf32>
    %43 = vector.broadcast %42 : vector<1x1x128xf32> to vector<1x16x128xf32>
    %44 = arith.subf %41, %43 : vector<1x16x128xf32>
    %45 = vector.broadcast %11 : vector<1x16x1xf32> to vector<1x16x128xf32>
    %46 = arith.mulf %44, %45 : vector<1x16x128xf32>
    %47 = arith.mulf %46, %46 : vector<1x16x128xf32>
    %cst_13 = arith.constant dense<0.000000e+00> : vector<1x128xf32>
    %48 = vector.multi_reduction <add>, %47, %cst_13 [1] : vector<1x16x128xf32> to vector<1x128xf32>
    %49 = vector.shape_cast %48 : vector<1x128xf32> to vector<1x1x128xf32>
    %50 = vector.broadcast %6 : vector<1x1x1xf32> to vector<1x1x128xf32>
    %51 = arith.mulf %49, %50 : vector<1x1x128xf32>
    %cst_14 = arith.constant 9.99999997E-7 : f32
    %52 = vector.broadcast %cst_14 : f32 to vector<1x1x128xf32>
    %53 = arith.addf %51, %52 : vector<1x1x128xf32>
    %54 = math.rsqrt %53 : vector<1x1x128xf32>
    %55 = arith.mulf %16, %54 : vector<1x1x128xf32>
    %56 = vector.broadcast %55 : vector<1x1x128xf32> to vector<1x16x128xf32>
    %57 = arith.mulf %44, %56 : vector<1x16x128xf32>
    %58 = vector.broadcast %18 : vector<1x1x128xf32> to vector<1x16x128xf32>
    %59 = arith.addf %57, %58 : vector<1x16x128xf32>
    %cst_15 = arith.constant 0.000000e+00 : f32
    %60 = vector.broadcast %cst_15 : f32 to vector<1x16x128xf32>
    %61 = arith.maximumf %59, %60 : vector<1x16x128xf32>
    %62 = arith.truncf %61 : vector<1x16x128xf32> to vector<1x16x128xbf16>
    %63 = vector.shape_cast %62 : vector<1x16x128xbf16> to vector<16x128xbf16>
    %c0_16 = arith.constant 0 : index
    %c0_17 = arith.constant 0 : index
    %64 = vector.load %arg5[%c0_16, %c0_17] : memref<128x128xbf16, #tpu.memory_space<vmem>>, vector<128x128xbf16>
    %cst_18 = arith.constant dense<0.000000e+00> : vector<16x128xf32>
    %65 = tpu.matmul %63, %64, %cst_18 {dimension_numbers = #tpu.dot_dimension_numbers<[1], [0], [0], [1], [0, 0, 1, 1], [], []>} : vector<16x128xbf16>, vector<128x128xbf16>, vector<16x128xf32> -> vector<16x128xf32>
    %66 = vector.shape_cast %65 : vector<16x128xf32> to vector<1x16x128xf32>
    %67 = vector.broadcast %23 : vector<1x1x128xf32> to vector<1x16x128xf32>
    %68 = arith.addf %66, %67 : vector<1x16x128xf32>
    %69 = vector.broadcast %11 : vector<1x16x1xf32> to vector<1x16x128xf32>
    %70 = arith.mulf %68, %69 : vector<1x16x128xf32>
    %cst_19 = arith.constant dense<0.000000e+00> : vector<1x128xf32>
    %71 = vector.multi_reduction <add>, %70, %cst_19 [1] : vector<1x16x128xf32> to vector<1x128xf32>
    %72 = vector.shape_cast %71 : vector<1x128xf32> to vector<1x1x128xf32>
    %73 = vector.broadcast %6 : vector<1x1x1xf32> to vector<1x1x128xf32>
    %74 = arith.mulf %72, %73 : vector<1x1x128xf32>
    %75 = arith.mulf %74, %29 : vector<1x1x128xf32>
    %76 = vector.broadcast %75 : vector<1x1x128xf32> to vector<1x16x128xf32>
    %77 = arith.subf %68, %76 : vector<1x16x128xf32>
    %78 = vector.broadcast %11 : vector<1x16x1xf32> to vector<1x16x128xf32>
    %79 = arith.mulf %77, %78 : vector<1x16x128xf32>
    %80 = arith.mulf %79, %79 : vector<1x16x128xf32>
    %cst_20 = arith.constant dense<0.000000e+00> : vector<1x128xf32>
    %81 = vector.multi_reduction <add>, %80, %cst_20 [1] : vector<1x16x128xf32> to vector<1x128xf32>
    %82 = vector.shape_cast %81 : vector<1x128xf32> to vector<1x1x128xf32>
    %83 = vector.broadcast %6 : vector<1x1x1xf32> to vector<1x1x128xf32>
    %84 = arith.mulf %82, %83 : vector<1x1x128xf32>
    %cst_21 = arith.constant 9.99999997E-7 : f32
    %85 = vector.broadcast %cst_21 : f32 to vector<1x1x128xf32>
    %86 = arith.addf %84, %85 : vector<1x1x128xf32>
    %87 = math.rsqrt %86 : vector<1x1x128xf32>
    %88 = arith.mulf %25, %87 : vector<1x1x128xf32>
    %89 = vector.broadcast %88 : vector<1x1x128xf32> to vector<1x16x128xf32>
    %90 = arith.mulf %77, %89 : vector<1x16x128xf32>
    %91 = vector.broadcast %27 : vector<1x1x128xf32> to vector<1x16x128xf32>
    %92 = arith.addf %90, %91 : vector<1x16x128xf32>
    %cst_22 = arith.constant 0.000000e+00 : f32
    %93 = vector.broadcast %cst_22 : f32 to vector<1x16x128xf32>
    %94 = arith.maximumf %92, %93 : vector<1x16x128xf32>
    %c0_23 = arith.constant 0 : index
    %c0_24 = arith.constant 0 : index
    %c0_25 = arith.constant 0 : index
    %95 = vector.load %arg7[%c0_23, %c0_24, %c0_25] : memref<1x16x128xf32, #tpu.memory_space<vmem>>, vector<1x16x128xf32>
    tpu.vector_store %arg7[%c0_23, %c0_24, %c0_25], %94 {strides = array<i32>} : memref<1x16x128xf32, #tpu.memory_space<vmem>>, vector<1x16x128xf32>,
    return
  }
  func.func @transform_0(%arg0: i32) -> (i32, i32, i32) {
    %c0_i32 = arith.constant 0 : i32
    %c0_i32_0 = arith.constant 0 : i32
    %c0_i32_1 = arith.constant 0 : i32
    return %arg0, %c0_i32, %c0_i32_0 : i32, i32, i32
  }
  func.func @transform_1(%arg0: i32) -> (i32, i32, i32) {
    %c0_i32 = arith.constant 0 : i32
    %c0_i32_0 = arith.constant 0 : i32
    %c0_i32_1 = arith.constant 0 : i32
    return %arg0, %c0_i32, %c0_i32_0 : i32, i32, i32
  }
  func.func @transform_2(%arg0: i32) -> (i32, i32) {
    %c0_i32 = arith.constant 0 : i32
    %c0_i32_0 = arith.constant 0 : i32
    %c0_i32_1 = arith.constant 0 : i32
    return %c0_i32, %c0_i32_0 : i32, i32
  }
  func.func @transform_3(%arg0: i32) -> (i32, i32) {
    %c0_i32 = arith.constant 0 : i32
    %c0_i32_0 = arith.constant 0 : i32
    %c0_i32_1 = arith.constant 0 : i32
    return %c0_i32, %c0_i32_0 : i32, i32
  }
  func.func @transform_4(%arg0: i32) -> (i32, i32) {
    %c0_i32 = arith.constant 0 : i32
    %c0_i32_0 = arith.constant 0 : i32
    %c0_i32_1 = arith.constant 0 : i32
    return %c0_i32, %c0_i32_0 : i32, i32
  }
  func.func @transform_5(%arg0: i32) -> (i32, i32) {
    %c0_i32 = arith.constant 0 : i32
    %c0_i32_0 = arith.constant 0 : i32
    %c0_i32_1 = arith.constant 0 : i32
    return %c0_i32, %c0_i32_0 : i32, i32
  }
  func.func @transform_6(%arg0: i32) -> (i32, i32, i32) {
    %c0_i32 = arith.constant 0 : i32
    %c0_i32_0 = arith.constant 0 : i32
    %c0_i32_1 = arith.constant 0 : i32
    return %arg0, %c0_i32, %c0_i32_0 : i32, i32, i32
  }
}

</mosaic_0001>

<llo_original>
// kernel: tpu_custom_call.1
$region0: #{tpu_custom_call.1}
  #allocation0 [shape = 'u32[]', space=smem, size = 0x4, offset = 0x4, fixed_abs, tag = 'smem constant byte address 0x4 - core index']
  #allocation1 [shape = 'u32[144,128]{1,0:T(1,128)}', space=vmem, size = 0x12000, scoped, tag = 'internal scratch']
  %s0 = inlined_call_operand.hbm [shape: s32[2,8,128], index: 0, kind: input, shape index: {}]
  %s1 = inlined_call_operand.hbm [shape: bf16[2,16,128], index: 1, kind: input, shape index: {}]
  %s2 = inlined_call_operand.hbm [shape: bf16[128,128], index: 2, kind: input, shape index: {}]
  %s3 = inlined_call_operand.hbm [shape: f32[8,128], index: 3, kind: input, shape index: {}]
  %s4 = inlined_call_operand.hbm [shape: bf16[128,128], index: 4, kind: input, shape index: {}]
  %s5 = inlined_call_operand.vmem [shape: f32[8,128], index: 5, kind: input, shape index: {}]
  %s6 = inlined_call_operand.hbm [shape: f32[2,16,128], index: 6, kind: output, shape index: {}]
  %s7 = sld [smem:[#allocation0]]
  $region77: #{tpu_custom_call.1} parent=0
    _
  %s9 = ssub.s32 1, %s7
  %s10 = scalar_select 0, %s9, %s7
  $region1: #{tpu_custom_call.1} parent=0
    #allocation2 [shape = 'u8[8192]{0}', space=vmem, size = 0x2000, scoped, tag = 'input window, operand 0']
    #allocation3 [shape = 's32[2]{0}', space=sflag, size = 0x8, scoped, tag = 'scoped memory for tpu_custom_call.1']
    #allocation4 [shape = 's32[2]{0}', space=sflag, size = 0x8, scoped, tag = 'scoped memory for tpu_custom_call.1']
    #allocation5 [shape = 'u8[8192]{0}', space=vmem, size = 0x2000, scoped, tag = 'input window, operand 1']
    #allocation6 [shape = 's32[2]{0}', space=sflag, size = 0x8, scoped, tag = 'scoped memory for tpu_custom_call.1']
    #allocation7 [shape = 'u8[32768]{0}', space=vmem, size = 0x8000, scoped, tag = 'input window, operand 2, single buffered']
    #allocation8 [shape = 'u8[4096]{0}', space=vmem, size = 0x1000, scoped, tag = 'input window, operand 3, single buffered']
    #allocation9 [shape = 's32[1]{0}', space=sflag, size = 0x4, scoped, tag = 'scoped memory for tpu_custom_call.1']
    #allocation10 [shape = 'u8[32768]{0}', space=vmem, size = 0x8000, scoped, tag = 'input window, operand 4, single buffered']
    #allocation11 [shape = 'u8[16384]{0}', space=vmem, size = 0x4000, scoped, tag = 'output window, operand 0']
    %11 = vsyncpa [#allocation3], 0
    %s12 = scalar_lea.sflag [#allocation3], 1
    %13 = vsyncpa %s12, 0
    %14 = vsyncpa [#allocation6], 0
    %s15 = scalar_lea.sflag [#allocation6], 1
    %16 = vsyncpa %s15, 0
    %17 = vsyncpa [#allocation9], 0
    %18 = vsyncpa [#allocation4], 0
    %s19 = scalar_lea.sflag [#allocation4], 1
    %20 = vsyncpa %s19, 0
    loop: start=0, step=1, limit=4
    $region2: #{tpu_custom_call.1} parent=1 // loop_pre_header
      _
    $region3: #{tpu_custom_call.1} parent=1 // loop_header
      %s22 = sphi 0, %s26
      %p23 = scmp.ge.s32.totalorder %s22, 4
      %s32 = sphi 0, %s34
      %s35 = sphi 0, %s32
      %s36 = sphi 0, %s35
      %s52 = sphi 0, %s36
      %s58 = sphi 0, %s60
      %s61 = sphi 0, %s58
      %s62 = sphi 0, %s61
      %s78 = sphi 0, %s62
      %s82 = sphi 0, %s82
      %s84 = sphi 0, %s82
      %s85 = sphi 0, %s84
      %s99 = sphi 0, %s85
      %s103 = sphi 0, %s103
      %s105 = sphi 0, %s103
      %s106 = sphi 0, %s105
      %s120 = sphi 0, %s106
      %s124 = sphi 0, %s124
      %s126 = sphi 0, %s124
      %s127 = sphi 0, %s126
      %s141 = sphi 0, %s127
      %s145 = sphi 0, %s145
      %s147 = sphi 0, %s145
      %s148 = sphi 0, %s147
      %s162 = sphi 0, %s148
      %s168 = sphi 0, %s170
      %s171 = sphi 0, %s168
      %s172 = sphi 0, %s171
      %s188 = sphi 0, %s172
    $region4: #{tpu_custom_call.1} parent=1 // loop_header_branch
      %25 = sbr.rel (%p23) target = $region8
    $region5: #{tpu_custom_call.1} parent=1 // loop_body
      %s27 = ssub.s32 %s22, 1
      %s28 = ssub.s32 %s22, 2
      %s29 = sadd.s32 %s22, 1
      %s30 = ssub.s32 %s22, %s29
      %p31 = scmp.eq.s32.totalorder %s30, 0
      %s33 = sadd.s32 %s32, 1
      %s34 = scalar_select %p31, %s32, %s33
      %p37 = pneg %p31
      %p38 = scmp.eq.s32.totalorder %s22, 1
      %p39 = por %p37, %p38
      %p40 = scmp.ne.s32.totalorder %s32, %s35
      %p41 = scmp.eq.s32.totalorder %s22, 0
      %p42 = por %p40, %p41
      %p43 = scmp.ne.s32.totalorder %s32, %s35
      %p44 = scmp.eq.s32.totalorder %s27, 1
      %p45 = por %p43, %p44
      %p46 = scmp.ne.s32.totalorder %s35, %s36
      %p47 = scmp.eq.s32.totalorder %s27, 0
      %p48 = por %p46, %p47
      %p49 = scmp.ne.s32.totalorder %s35, %s36
      %p50 = scmp.eq.s32.totalorder %s28, 1
      %p51 = por %p49, %p50
      %p53 = scmp.ne.s32.totalorder %s36, %s52
      %p54 = scmp.eq.s32.totalorder %s28, 0
      %p55 = por %p53, %p54
      %s56 = ssub.s32 %s22, %s29
      %p57 = scmp.eq.s32.totalorder %s56, 0
      %s59 = sadd.s32 %s58, 1
      %s60 = scalar_select %p57, %s58, %s59
      %p63 = pneg %p57
      %p64 = scmp.eq.s32.totalorder %s22, 1
      %p65 = por %p63, %p64
      %p66 = scmp.ne.s32.totalorder %s58, %s61
      %p67 = scmp.eq.s32.totalorder %s22, 0
      %p68 = por %p66, %p67
      %p69 = scmp.ne.s32.totalorder %s58, %s61
      %p70 = scmp.eq.s32.totalorder %s27, 1
      %p71 = por %p69, %p70
      %p72 = scmp.ne.s32.totalorder %s61, %s62
      %p73 = scmp.eq.s32.totalorder %s27, 0
      %p74 = por %p72, %p73
      %p75 = scmp.ne.s32.totalorder %s61, %s62
      %p76 = scmp.eq.s32.totalorder %s28, 1
      %p77 = por %p75, %p76
      %p79 = scmp.ne.s32.totalorder %s62, %s78
      %p80 = scmp.eq.s32.totalorder %s28, 0
      %p81 = por %p79, %p80
      %s83 = sadd.s32 %s82, 1
      %p86 = scmp.eq.s32.totalorder %s22, 1
      %p87 = scmp.ne.s32.totalorder %s82, %s84
      %p88 = scmp.eq.s32.totalorder %s22, 0
      %p89 = por %p87, %p88
      %p90 = scmp.ne.s32.totalorder %s82, %s84
      %p91 = scmp.eq.s32.totalorder %s27, 1
      %p92 = por %p90, %p91
      %p93 = scmp.ne.s32.totalorder %s84, %s85
      %p94 = scmp.eq.s32.totalorder %s27, 0
      %p95 = por %p93, %p94
      %p96 = scmp.ne.s32.totalorder %s84, %s85
      %p97 = scmp.eq.s32.totalorder %s28, 1
      %p98 = por %p96, %p97
      %p100 = scmp.ne.s32.totalorder %s85, %s99
      %p101 = scmp.eq.s32.totalorder %s28, 0
      %p102 = por %p100, %p101
      %s104 = sadd.s32 %s103, 1
      %p107 = scmp.eq.s32.totalorder %s22, 1
      %p108 = scmp.ne.s32.totalorder %s103, %s105
      %p109 = scmp.eq.s32.totalorder %s22, 0
      %p110 = por %p108, %p109
      %p111 = scmp.ne.s32.totalorder %s103, %s105
      %p112 = scmp.eq.s32.totalorder %s27, 1
      %p113 = por %p111, %p112
      %p114 = scmp.ne.s32.totalorder %s105, %s106
      %p115 = scmp.eq.s32.totalorder %s27, 0
      %p116 = por %p114, %p115
      %p117 = scmp.ne.s32.totalorder %s105, %s106
      %p118 = scmp.eq.s32.totalorder %s28, 1
      %p119 = por %p117, %p118
      %p121 = scmp.ne.s32.totalorder %s106, %s120
      %p122 = scmp.eq.s32.totalorder %s28, 0
      %p123 = por %p121, %p122
      %s125 = sadd.s32 %s124, 1
      %p128 = scmp.eq.s32.totalorder %s22, 1
      %p129 = scmp.ne.s32.totalorder %s124, %s126
      %p130 = scmp.eq.s32.totalorder %s22, 0
      %p131 = por %p129, %p130
      %p132 = scmp.ne.s32.totalorder %s124, %s126
      %p133 = scmp.eq.s32.totalorder %s27, 1
      %p134 = por %p132, %p133
      %p135 = scmp.ne.s32.totalorder %s126, %s127
      %p136 = scmp.eq.s32.totalorder %s27, 0
      %p137 = por %p135, %p136
      %p138 = scmp.ne.s32.totalorder %s126, %s127
      %p139 = scmp.eq.s32.totalorder %s28, 1
      %p140 = por %p138, %p139
      %p142 = scmp.ne.s32.totalorder %s127, %s141
      %p143 = scmp.eq.s32.totalorder %s28, 0
      %p144 = por %p142, %p143
      %s146 = sadd.s32 %s145, 1
      %p149 = scmp.eq.s32.totalorder %s22, 1
      %p150 = scmp.ne.s32.totalorder %s145, %s147
      %p151 = scmp.eq.s32.totalorder %s22, 0
      %p152 = por %p150, %p151
      %p153 = scmp.ne.s32.totalorder %s145, %s147
      %p154 = scmp.eq.s32.totalorder %s27, 1
      %p155 = por %p153, %p154
      %p156 = scmp.ne.s32.totalorder %s147, %s148
      %p157 = scmp.eq.s32.totalorder %s27, 0
      %p158 = por %p156, %p157
      %p159 = scmp.ne.s32.totalorder %s147, %s148
      %p160 = scmp.eq.s32.totalorder %s28, 1
      %p161 = por %p159, %p160
      %p163 = scmp.ne.s32.totalorder %s148, %s162
      %p164 = scmp.eq.s32.totalorder %s28, 0
      %p165 = por %p163, %p164
      %s166 = ssub.s32 %s22, %s29
      %p167 = scmp.eq.s32.totalorder %s166, 0
      %s169 = sadd.s32 %s168, 1
      %s170 = scalar_select %p167, %s168, %s169
      %p173 = pneg %p167
      %p174 = scmp.eq.s32.totalorder %s22, 1
      %p175 = por %p173, %p174
      %p176 = scmp.ne.s32.totalorder %s168, %s171
      %p177 = scmp.eq.s32.totalorder %s22, 0
      %p178 = por %p176, %p177
      %p179 = scmp.ne.s32.totalorder %s168, %s171
      %p180 = scmp.eq.s32.totalorder %s27, 1
      %p181 = por %p179, %p180
      %p182 = scmp.ne.s32.totalorder %s171, %s172
      %p183 = scmp.eq.s32.totalorder %s27, 0
      %p184 = por %p182, %p183
      %p185 = scmp.ne.s32.totalorder %s171, %s172
      %p186 = scmp.eq.s32.totalorder %s28, 1
      %p187 = por %p185, %p186
      %p189 = scmp.ne.s32.totalorder %s172, %s188
      %p190 = scmp.eq.s32.totalorder %s28, 0
      %p191 = por %p189, %p190
      %p192 = scmp.le.s32.totalorder 1, %s22
      %p193 = scmp.lt.s32.totalorder %s22, 3
      %p194 = pnand %p192, %p193
      %p195 = pneg %p194
      // Predicated region
      $region9: #{tpu_custom_call.1} parent=5 // pred_check
        _
      $region10: #{tpu_custom_call.1} parent=5 // pred_check_branch
        %197 = sbr.rel (%p194) target = $region12
      $region11: #{tpu_custom_call.1} parent=5 // pred_region
        %s198 = ssub.s32 %s22, 1
        // Predicated region
        $region13: #{tpu_custom_call.1} parent=11 // pred_check
          %p199 = pneg %p95
        $region14: #{tpu_custom_call.1} parent=11 // pred_check_branch
          %201 = sbr.rel (%p199) target = $region16
        $region15: #{tpu_custom_call.1} parent=11 // pred_region
          %s203 = ssub.s32 1024, 1024
          %204 = vsyncadd [#allocation6], %s203
          %s205 = sshll.u32 [#allocation7], 4
          %s206 = int_to_ptr.vmem [resolvable:$true] %s205
          %211 = dma.hbm_to_vmem [thread:$0]  %s2, 1024, %s206, [#allocation6], 64, 64, 4
        $region16: #{tpu_custom_call.1} parent=11 // pred_fallthru
          _
        // Predicated region
        $region17: #{tpu_custom_call.1} parent=11 // pred_check
          %p212 = pneg %p116
        $region18: #{tpu_custom_call.1} parent=11 // pred_check_branch
          %214 = sbr.rel (%p212) target = $region20
        $region19: #{tpu_custom_call.1} parent=11 // pred_region
          %s216 = ssub.s32 128, 128
          %217 = vsyncadd [#allocation9], %s216
          %s219 = sshll.u32 [#allocation8], 4
          %s220 = int_to_ptr.vmem [resolvable:$true] %s219
          %222 = dma.hbm_to_vmem [thread:$0]  %s3, 128, %s220, [#allocation9]
        $region20: #{tpu_custom_call.1} parent=11 // pred_fallthru
          _
        // Predicated region
        $region21: #{tpu_custom_call.1} parent=11 // pred_check
          %p223 = pneg %p137
        $region22: #{tpu_custom_call.1} parent=11 // pred_check_branch
          %225 = sbr.rel (%p223) target = $region24
        $region23: #{tpu_custom_call.1} parent=11 // pred_region
          %s227 = ssub.s32 1024, 1024
          %228 = vsyncadd [#allocation9], %s227
          %s229 = sshll.u32 [#allocation10], 4
          %s230 = int_to_ptr.vmem [resolvable:$true] %s229
          %235 = dma.hbm_to_vmem [thread:$0]  %s4, 1024, %s230, [#allocation9], 64, 64, 4
        $region24: #{tpu_custom_call.1} parent=11 // pred_fallthru
          _
        // Predicated region
        $region25: #{tpu_custom_call.1} parent=11 // pred_check
          %p236 = pneg %p158
        $region26: #{tpu_custom_call.1} parent=11 // pred_check_branch
          %238 = sbr.rel (%p236) target = $region28
        $region27: #{tpu_custom_call.1} parent=11 // pred_region
          _
        $region28: #{tpu_custom_call.1} parent=11 // pred_fallthru
          _
      $region12: #{tpu_custom_call.1} parent=5 // pred_fallthru
        _
      %p239 = scmp.lt.s32.totalorder %s22, 2
      // Predicated region
      $region29: #{tpu_custom_call.1} parent=5 // pred_check
        %p240 = pneg %p239
      $region30: #{tpu_custom_call.1} parent=5 // pred_check_branch
        %242 = sbr.rel (%p240) target = $region32
      $region31: #{tpu_custom_call.1} parent=5 // pred_region
        // Predicated region
        $region33: #{tpu_custom_call.1} parent=31 // pred_check
          %p243 = pneg %p42
        $region34: #{tpu_custom_call.1} parent=31 // pred_check_branch
          %245 = sbr.rel (%p243) target = $region36
        $region35: #{tpu_custom_call.1} parent=31 // pred_region
          %s246 = sand.u32 %s32, 1
          %s247 = scalar_lea.sflag [#allocation3], %s246
          %s248 = sand.u32 %s32, 1
          %s249 = smul.addr %s248, 8
          %s250 = scalar_lea.vmem [#allocation2], %s249
          %s252 = ssub.s32 128, 128
          %253 = vsyncadd %s247, %s252
          %s254 = smul.addr %s22, 128
          %s255 = scalar_lea.hbm %s0, %s254
          %s257 = sshll.u32 %s250, 4
          %s258 = int_to_ptr.vmem [resolvable:$true] %s257
          %260 = dma.hbm_to_vmem [thread:$0]  %s255, 128, %s258, %s247
        $region36: #{tpu_custom_call.1} parent=31 // pred_fallthru
          _
        // Predicated region
        $region37: #{tpu_custom_call.1} parent=31 // pred_check
          %p261 = pneg %p68
        $region38: #{tpu_custom_call.1} parent=31 // pred_check_branch
          %263 = sbr.rel (%p261) target = $region40
        $region39: #{tpu_custom_call.1} parent=31 // pred_region
          %s264 = sand.u32 %s22, 1
          %s265 = scalar_lea.sflag [#allocation6], %s264
          %s266 = sand.u32 %s58, 1
          %s267 = smul.addr %s266, 8
          %s268 = scalar_lea.vmem [#allocation5], %s267
          %s270 = ssub.s32 128, 128
          %271 = vsyncadd %s265, %s270
          %s272 = smul.addr %s22, 2
          %s273 = smul.addr %s272, 64
          %s274 = scalar_lea.hbm %s1, %s273
          %s275 = sshll.u32 %s268, 4
          %s276 = int_to_ptr.vmem [resolvable:$true] %s275
          %281 = dma.hbm_to_vmem [thread:$0]  %s274, 128, %s276, %s265, 64, 64, 4
        $region40: #{tpu_custom_call.1} parent=31 // pred_fallthru
          _
      $region32: #{tpu_custom_call.1} parent=5 // pred_fallthru
        _
      %p282 = scmp.le.s32.totalorder 1, %s22
      %p283 = scmp.lt.s32.totalorder %s22, 3
      %p284 = pnand %p282, %p283
      %p285 = pneg %p284
      // Predicated region
      $region41: #{tpu_custom_call.1} parent=5 // pred_check
        _
      $region42: #{tpu_custom_call.1} parent=5 // pred_check_branch
        %287 = sbr.rel (%p284) target = $region44
      $region43: #{tpu_custom_call.1} parent=5 // pred_region
        %s288 = ssub.s32 %s22, 1
        %s289 = sand.u32 %s35, 1
        %s290 = scalar_lea.sflag [#allocation3], %s289
        %s291 = sand.u32 %s35, 1
        %s292 = smul.addr %s291, 8
        %s293 = scalar_lea.vmem [#allocation2], %s292
        // Predicated region
        $region45: #{tpu_custom_call.1} parent=43 // pred_check
          %p294 = pneg %p48
        $region46: #{tpu_custom_call.1} parent=43 // pred_check_branch
          %296 = sbr.rel (%p294) target = $region48
        $region47: #{tpu_custom_call.1} parent=43 // pred_region
          %297 = dma.done %s290, 128
        $region48: #{tpu_custom_call.1} parent=43 // pred_fallthru
          _
        %s298 = sand.u32 %s27, 1
        %s299 = scalar_lea.sflag [#allocation6], %s298
        %s300 = sand.u32 %s61, 1
        %s301 = smul.addr %s300, 8
        %s302 = scalar_lea.vmem [#allocation5], %s301
        // Predicated region
        $region49: #{tpu_custom_call.1} parent=43 // pred_check
          %p303 = pneg %p74
        $region50: #{tpu_custom_call.1} parent=43 // pred_check_branch
          %305 = sbr.rel (%p303) target = $region52
        $region51: #{tpu_custom_call.1} parent=43 // pred_region
          %306 = dma.done %s299, 128
        $region52: #{tpu_custom_call.1} parent=43 // pred_fallthru
          _
        // Predicated region
        $region53: #{tpu_custom_call.1} parent=43 // pred_check
          %p307 = pneg %p95
        $region54: #{tpu_custom_call.1} parent=43 // pred_check_branch
          %309 = sbr.rel (%p307) target = $region56
        $region55: #{tpu_custom_call.1} parent=43 // pred_region
          %310 = dma.done [#allocation6], 1024
        $region56: #{tpu_custom_call.1} parent=43 // pred_fallthru
          _
        // Predicated region
        $region57: #{tpu_custom_call.1} parent=43 // pred_check
          %p311 = pneg %p116
        $region58: #{tpu_custom_call.1} parent=43 // pred_check_branch
          %313 = sbr.rel (%p311) target = $region60
        $region59: #{tpu_custom_call.1} parent=43 // pred_region
          %314 = dma.done [#allocation9], 128
        $region60: #{tpu_custom_call.1} parent=43 // pred_fallthru
          _
        // Predicated region
        $region61: #{tpu_custom_call.1} parent=43 // pred_check
          %p315 = pneg %p137
        $region62: #{tpu_custom_call.1} parent=43 // pred_check_branch
          %317 = sbr.rel (%p315) target = $region64
        $region63: #{tpu_custom_call.1} parent=43 // pred_region
          %318 = dma.done [#allocation9], 1024
        $region64: #{tpu_custom_call.1} parent=43 // pred_fallthru
          _
        %s319 = sand.u32 %s35, 1
        %s320 = scalar_lea.sflag [#allocation3], %s319
        %s321 = sand.u32 %s35, 1
        %s322 = smul.addr %s321, 8
        %s323 = scalar_lea.vmem [#allocation2], %s322
        %p324 = pneg %p48
        %p325 = pneg %p45
        %s326 = sand.u32 %s27, 1
        %s327 = scalar_lea.sflag [#allocation6], %s326
        %s328 = sand.u32 %s61, 1
        %s329 = smul.addr %s328, 8
        %s330 = scalar_lea.vmem [#allocation5], %s329
        %p331 = pneg %p74
        %p332 = pneg %p71
        %p333 = pneg %p95
        %p334 = pneg %p92
        %p335 = pneg %p116
        %p336 = pneg %p113
        %p337 = pneg %p137
        %p338 = pneg %p134
        %p339 = pneg %p158
        %p340 = pneg %p155
        %p341 = pneg %p184
        %p342 = pneg %p181
        %s343 = sand.u32 %s171, 1
        %s344 = scalar_lea.sflag [#allocation4], %s343
        %s345 = sand.u32 %s171, 1
        %s346 = smul.addr %s345, 16
        %s347 = scalar_lea.vmem [#allocation11], %s346
        %v349 = vld [vmem:[%s293] sm:$0xff]
        %vm350 = vcmp.gt.s32.totalorder %v349, 1
        %v351 = vsel %vm350, %v349, 1
        %v352 = vcvt.s32.f32 %v351
        %v353 = vrcp.pop %v352
        %v354 = vmul.f32 1.0, %v353
        %v355 = vlaneseq
        %v356 = vshrl.u32 %v355, 7
        %v357 = vadd.s32 %v356, 8
        %v358 = vlaneseq
        %v359 = vshrl.u32 %v358, 7
        %v360 = vsub.s32 0, %v359
        %v361 = vrot.slane %v349, %v360
        %vm362 = vcmp.lt.s32.totalorder %v356, %v361
        %vm363 = vcmp.lt.s32.totalorder %v357, %v361
        %v364 = vsel %vm362, 1, 0
        %v365 = vsel %vm363, 1, 0
        %v366 = vcvt.s32.f32 %v364
        %v367 = vcvt.s32.f32 %v365
        %v368 = vld [vmem:[#allocation8] sm:$0xff]
        %v369 = vld [vmem:[%s5] sm:$0xff]
        %v370 = vld [vmem:[%s302] sm:$0xf]
        %v371 = vld [vmem:[%s302 + $0x4] sm:$0xf]
        %v372 = vld [vmem:[#allocation7] sm:$0xf]
        %v373 = vld [vmem:[#allocation7 + $0x4] sm:$0xf]
        %v374 = vld [vmem:[#allocation7 + $0x8] sm:$0xf]
        %v375 = vld [vmem:[#allocation7 + $0xc] sm:$0xf]
        %v376 = vld [vmem:[#allocation7 + $0x10] sm:$0xf]
        %v377 = vld [vmem:[#allocation7 + $0x14] sm:$0xf]
        %v378 = vld [vmem:[#allocation7 + $0x18] sm:$0xf]
        %v379 = vld [vmem:[#allocation7 + $0x1c] sm:$0xf]
        %v380 = vld [vmem:[#allocation7 + $0x20] sm:$0xf]
        %v381 = vld [vmem:[#allocation7 + $0x24] sm:$0xf]
        %v382 = vld [vmem:[#allocation7 + $0x28] sm:$0xf]
        %v383 = vld [vmem:[#allocation7 + $0x2c] sm:$0xf]
        %v384 = vld [vmem:[#allocation7 + $0x30] sm:$0xf]
        %v385 = vld [vmem:[#allocation7 + $0x34] sm:$0xf]
        %v386 = vld [vmem:[#allocation7 + $0x38] sm:$0xf]
        %v387 = vld [vmem:[#allocation7 + $0x3c] sm:$0xf]
        %v390 = vunpack.c.l.b16 %v370
        %v391 = vunpack.c.l.b16 %v371
        %v392 = vpack.c.b16 %v391, %v390
        %v410 = vunpack.c.l.b16 %v372
        %v411 = vunpack.c.l.b16 %v373
        %v412 = vunpack.c.l.b16 %v374
        %v413 = vunpack.c.l.b16 %v375
        %v414 = vunpack.c.l.b16 %v376
        %v415 = vunpack.c.l.b16 %v377
        %v416 = vunpack.c.l.b16 %v378
        %v417 = vunpack.c.l.b16 %v379
        %v418 = vunpack.c.l.b16 %v380
        %v419 = vunpack.c.l.b16 %v381
        %v420 = vunpack.c.l.b16 %v382
        %v421 = vunpack.c.l.b16 %v383
        %v422 = vunpack.c.l.b16 %v384
        %v423 = vunpack.c.l.b16 %v385
        %v424 = vunpack.c.l.b16 %v386
        %v425 = vunpack.c.l.b16 %v387
        %v426 = vpack.c.b16 %v411, %v410
        %v427 = vpack.c.b16 %v413, %v412
        %v428 = vpack.c.b16 %v415, %v414
        %v429 = vpack.c.b16 %v417, %v416
        %v430 = vpack.c.b16 %v419, %v418
        %v431 = vpack.c.b16 %v421, %v420
        %v432 = vpack.c.b16 %v423, %v422
        %v433 = vpack.c.b16 %v425, %v424
        %442 = vmatprep.subr.bf16.mxu0 0
        %443 = vmatpush1.bf16.msra.mxu0 %v433
        %444 = vmatprep.subr.bf16.mxu0 0
        %445 = vmatpush1.bf16.msra.mxu0 %v432
        %446 = vmatprep.subr.bf16.mxu0 0
        %447 = vmatpush1.bf16.msra.mxu0 %v431
        %448 = vmatprep.subr.bf16.mxu0 0
        %449 = vmatpush1.bf16.msra.mxu0 %v430
        %450 = vmatprep.subr.bf16.mxu0 0
        %451 = vmatpush1.bf16.msra.mxu0 %v429
        %452 = vmatprep.subr.bf16.mxu0 0
        %453 = vmatpush1.bf16.msra.mxu0 %v428
        %454 = vmatprep.subr.bf16.mxu0 0
        %455 = vmatpush1.bf16.msra.mxu0 %v427
        %456 = vmatprep.subr.bf16.mxu0 0
        %457 = vmatpush1.bf16.msra.mxu0 %v426
        %458 = vmatprep.subr.bf16.mxu0 0
        %459 = vmatpush2.bf16.msra.mxu0 0
        %460 = vmatprep.subr.bf16.mxu0 0
        %461 = vmatpush2.bf16.msra.mxu0 0
        %462 = vmatprep.subr.bf16.mxu0 0
        %463 = vmatpush2.bf16.msra.mxu0 0
        %464 = vmatprep.subr.bf16.mxu0 0
        %465 = vmatpush2.bf16.msra.mxu0 0
        %466 = vmatprep.subr.bf16.mxu0 0
        %467 = vmatpush2.bf16.msra.mxu0 0
        %468 = vmatprep.subr.bf16.mxu0 0
        %469 = vmatpush2.bf16.msra.mxu0 0
        %470 = vmatprep.subr.bf16.mxu0 0
        %471 = vmatpush2.bf16.msra.mxu0 0
        %472 = vmatprep.subr.bf16.mxu0 0
        %473 = vmatpush2.bf16.msra.mxu0 0
        %474 = vmatprep.mubr.bf16.mxu0 0
        %475 = vmatmul.mubr.bf16.gmra.mxu0 %v392
        %v476 = vpop.f32.mrf.mxu0
        %v477 = vadd.f32 0.0, %v476
        %v478 = vpop.f32.mrf.mxu0
        %v479 = vpop.f32.mrf.mxu0
        %v480 = vadd.f32 0.0, %v479
        %v481 = vpop.f32.mrf.mxu0
        %482 = vdwg.mxu0
        %v483 = vadd.f32 %v477, %v480
        %v484 = vrot.slane %v483, 4
        %v485 = vadd.f32 %v483, %v484
        %v486 = vrot.slane %v485, 2
        %v487 = vadd.f32 %v485, %v486
        %v488 = vrot.slane %v487, 1
        %v489 = vadd.f32 %v487, %v488
        %491 = vset.pattern.permute.xlu0 0
        %492 = vperm.xlu0 %491, %v354
        %v493 = vpop.permute.xlu0 %492
        %v495 = vmul.f32 %v489, %v493
        %v496 = vadd.f32 %v495, %v368
        %v497 = vlaneseq
        %v498 = vshrl.u32 %v497, 7
        %v499 = vsub.s32 0, %v498
        %v500 = vrot.slane %v368, %v499
        %v501 = vadd.f32 %v477, %v500
        %v502 = vadd.f32 %v480, %v500
        %v504 = vrot.slane %v368, 3
        %v506 = vmul.f32 %v496, %v504
        %v507 = vlaneseq
        %v508 = vshrl.u32 %v507, 7
        %v509 = vsub.s32 0, %v508
        %v510 = vrot.slane %v506, %v509
        %v511 = vsub.f32 %v501, %v510
        %v512 = vsub.f32 %v502, %v510
        %514 = vset.pattern.permute.xlu0 0
        %515 = vperm.xlu0 %514, %v366
        %v516 = vpop.permute.xlu0 %515
        %519 = vset.pattern.permute.xlu0 0
        %520 = vperm.xlu0 %519, %v367
        %v521 = vpop.permute.xlu0 %520
        %v523 = vmul.f32 %v511, %v516
        %v524 = vmul.f32 %v512, %v521
        %v525 = vmul.f32 %v523, %v523
        %v526 = vmul.f32 %v524, %v524
        %v527 = vadd.f32 %v525, %v526
        %v528 = vrot.slane %v527, 4
        %v529 = vadd.f32 %v527, %v528
        %v530 = vrot.slane %v529, 2
        %v531 = vadd.f32 %v529, %v530
        %v532 = vrot.slane %v531, 1
        %v533 = vadd.f32 %v531, %v532
        %v534 = vmul.f32 %v533, %v493
        %v535 = vadd.f32 %v534, 1e-06
        %v536 = vrsqrt.pop %v535
        %v538 = vrot.slane %v536, 7
        %v540 = vmul.f32 %v368, %v538
        %v541 = vlaneseq
        %v542 = vshrl.u32 %v541, 7
        %v543 = vsub.s32 1, %v542
        %v544 = vrot.slane %v540, %v543
        %v545 = vmul.f32 %v511, %v544
        %v546 = vmul.f32 %v512, %v544
        %v547 = vlaneseq
        %v548 = vshrl.u32 %v547, 7
        %v549 = vsub.s32 2, %v548
        %v550 = vrot.slane %v368, %v549
        %v551 = vadd.f32 %v545, %v550
        %v552 = vadd.f32 %v546, %v550
        %v553 = vmax.f32 %v551, 0.0
        %v554 = vmax.f32 %v552, 0.0
        %v555 = vpack.c.bf16 %v554, %v553
        %v556 = vld [vmem:[#allocation10] sm:$0xf]
        %v557 = vld [vmem:[#allocation10 + $0x4] sm:$0xf]
        %v558 = vld [vmem:[#allocation10 + $0x8] sm:$0xf]
        %v559 = vld [vmem:[#allocation10 + $0xc] sm:$0xf]
        %v560 = vld [vmem:[#allocation10 + $0x10] sm:$0xf]
        %v561 = vld [vmem:[#allocation10 + $0x14] sm:$0xf]
        %v562 = vld [vmem:[#allocation10 + $0x18] sm:$0xf]
        %v563 = vld [vmem:[#allocation10 + $0x1c] sm:$0xf]
        %v564 = vld [vmem:[#allocation10 + $0x20] sm:$0xf]
        %v565 = vld [vmem:[#allocation10 + $0x24] sm:$0xf]
        %v566 = vld [vmem:[#allocation10 + $0x28] sm:$0xf]
        %v567 = vld [vmem:[#allocation10 + $0x2c] sm:$0xf]
        %v568 = vld [vmem:[#allocation10 + $0x30] sm:$0xf]
        %v569 = vld [vmem:[#allocation10 + $0x34] sm:$0xf]
        %v570 = vld [vmem:[#allocation10 + $0x38] sm:$0xf]
        %v571 = vld [vmem:[#allocation10 + $0x3c] sm:$0xf]
        %v588 = vunpack.c.l.b16 %v556
        %v589 = vunpack.c.l.b16 %v557
        %v590 = vunpack.c.l.b16 %v558
        %v591 = vunpack.c.l.b16 %v559
        %v592 = vunpack.c.l.b16 %v560
        %v593 = vunpack.c.l.b16 %v561
        %v594 = vunpack.c.l.b16 %v562
        %v595 = vunpack.c.l.b16 %v563
        %v596 = vunpack.c.l.b16 %v564
        %v597 = vunpack.c.l.b16 %v565
        %v598 = vunpack.c.l.b16 %v566
        %v599 = vunpack.c.l.b16 %v567
        %v600 = vunpack.c.l.b16 %v568
        %v601 = vunpack.c.l.b16 %v569
        %v602 = vunpack.c.l.b16 %v570
        %v603 = vunpack.c.l.b16 %v571
        %v604 = vpack.c.b16 %v589, %v588
        %v605 = vpack.c.b16 %v591, %v590
        %v606 = vpack.c.b16 %v593, %v592
        %v607 = vpack.c.b16 %v595, %v594
        %v608 = vpack.c.b16 %v597, %v596
        %v609 = vpack.c.b16 %v599, %v598
        %v610 = vpack.c.b16 %v601, %v600
        %v611 = vpack.c.b16 %v603, %v602
        %620 = vmatprep.subr.bf16.mxu0 0
        %621 = vmatpush1.bf16.msra.mxu0 %v611
        %622 = vmatprep.subr.bf16.mxu0 0
        %623 = vmatpush1.bf16.msra.mxu0 %v610
        %624 = vmatprep.subr.bf16.mxu0 0
        %625 = vmatpush1.bf16.msra.mxu0 %v609
        %626 = vmatprep.subr.bf16.mxu0 0
        %627 = vmatpush1.bf16.msra.mxu0 %v608
        %628 = vmatprep.subr.bf16.mxu0 0
        %629 = vmatpush1.bf16.msra.mxu0 %v607
        %630 = vmatprep.subr.bf16.mxu0 0
        %631 = vmatpush1.bf16.msra.mxu0 %v606
        %632 = vmatprep.subr.bf16.mxu0 0
        %633 = vmatpush1.bf16.msra.mxu0 %v605
        %634 = vmatprep.subr.bf16.mxu0 0
        %635 = vmatpush1.bf16.msra.mxu0 %v604
        %636 = vmatprep.subr.bf16.mxu0 0
        %637 = vmatpush2.bf16.msra.mxu0 0
        %638 = vmatprep.subr.bf16.mxu0 0
        %639 = vmatpush2.bf16.msra.mxu0 0
        %640 = vmatprep.subr.bf16.mxu0 0
        %641 = vmatpush2.bf16.msra.mxu0 0
        %642 = vmatprep.subr.bf16.mxu0 0
        %643 = vmatpush2.bf16.msra.mxu0 0
        %644 = vmatprep.subr.bf16.mxu0 0
        %645 = vmatpush2.bf16.msra.mxu0 0
        %646 = vmatprep.subr.bf16.mxu0 0
        %647 = vmatpush2.bf16.msra.mxu0 0
        %648 = vmatprep.subr.bf16.mxu0 0
        %649 = vmatpush2.bf16.msra.mxu0 0
        %650 = vmatprep.subr.bf16.mxu0 0
        %651 = vmatpush2.bf16.msra.mxu0 0
        %652 = vmatprep.mubr.bf16.mxu0 0
        %653 = vmatmul.mubr.bf16.gmra.mxu0 %v555
        %v654 = vpop.f32.mrf.mxu0
        %v655 = vadd.f32 0.0, %v654
        %v656 = vpop.f32.mrf.mxu0
        %v657 = vpop.f32.mrf.mxu0
        %v658 = vadd.f32 0.0, %v657
        %v659 = vpop.f32.mrf.mxu0
        %660 = vdwg.mxu0
        %v661 = vlaneseq
        %v662 = vshrl.u32 %v661, 7
        %v663 = vsub.s32 0, %v662
        %v664 = vrot.slane %v369, %v663
        %v665 = vadd.f32 %v655, %v664
        %v666 = vadd.f32 %v658, %v664
        %v667 = vmul.f32 %v665, %v516
        %v668 = vmul.f32 %v666, %v521
        %v669 = vadd.f32 %v667, %v668
        %v670 = vrot.slane %v669, 4
        %v671 = vadd.f32 %v669, %v670
        %v672 = vrot.slane %v671, 2
        %v673 = vadd.f32 %v671, %v672
        %v674 = vrot.slane %v673, 1
        %v675 = vadd.f32 %v673, %v674
        %v676 = vmul.f32 %v675, %v493
        %v678 = vrot.slane %v369, 3
        %v680 = vmul.f32 %v676, %v678
        %v681 = vlaneseq
        %v682 = vshrl.u32 %v681, 7
        %v683 = vsub.s32 0, %v682
        %v684 = vrot.slane %v680, %v683
        %v685 = vsub.f32 %v665, %v684
        %v686 = vsub.f32 %v666, %v684
        %v687 = vmul.f32 %v685, %v516
        %v688 = vmul.f32 %v686, %v521
        %v689 = vmul.f32 %v687, %v687
        %v690 = vmul.f32 %v688, %v688
        %v691 = vadd.f32 %v689, %v690
        %v692 = vrot.slane %v691, 4
        %v693 = vadd.f32 %v691, %v692
        %v694 = vrot.slane %v693, 2
        %v695 = vadd.f32 %v693, %v694
        %v696 = vrot.slane %v695, 1
        %v697 = vadd.f32 %v695, %v696
        %v698 = vmul.f32 %v697, %v493
        %v699 = vadd.f32 %v698, 1e-06
        %v700 = vrsqrt.pop %v699
        %v702 = vrot.slane %v700, 7
        %v704 = vmul.f32 %v369, %v702
        %v705 = vlaneseq
        %v706 = vshrl.u32 %v705, 7
        %v707 = vsub.s32 1, %v706
        %v708 = vrot.slane %v704, %v707
        %v709 = vmul.f32 %v685, %v708
        %v710 = vmul.f32 %v686, %v708
        %v711 = vlaneseq
        %v712 = vshrl.u32 %v711, 7
        %v713 = vsub.s32 2, %v712
        %v714 = vrot.slane %v369, %v713
        %v715 = vadd.f32 %v709, %v714
        %v716 = vadd.f32 %v710, %v714
        %v717 = vmax.f32 %v715, 0.0
        %v718 = vmax.f32 %v716, 0.0
        %719 = vst [vmem:[%s347] sm:$0xff] %v717
        %720 = vst [vmem:[%s347 + $0x8] sm:$0xff] %v718
        %s721 = sand.u32 %s171, 1
        %s722 = scalar_lea.sflag [#allocation4], %s721
        %s723 = sand.u32 %s171, 1
        %s724 = smul.addr %s723, 16
        %s725 = scalar_lea.vmem [#allocation11], %s724
        // Predicated region
        $region65: #{tpu_custom_call.1} parent=43 // pred_check
          %p726 = pneg %p181
        $region66: #{tpu_custom_call.1} parent=43 // pred_check_branch
          %728 = sbr.rel (%p726) target = $region68
        $region67: #{tpu_custom_call.1} parent=43 // pred_region
          %s730 = ssub.s32 256, 256
          %731 = vsyncadd %s722, %s730
          %s732 = smul.addr %s27, 2
          %s733 = smul.addr %s732, 128
          %s734 = scalar_lea.hbm %s6, %s733
          %s735 = sshll.u32 %s725, 4
          %s736 = int_to_ptr.vmem [resolvable:$true] %s735
          %741 = dma.vmem_to_hbm [thread:$0]  %s736, 256, %s734, %s722, 128, 128, 8
        $region68: #{tpu_custom_call.1} parent=43 // pred_fallthru
          _
      $region44: #{tpu_custom_call.1} parent=5 // pred_fallthru
        _
      %p742 = scmp.le.s32.totalorder 2, %s22
      // Predicated region
      $region69: #{tpu_custom_call.1} parent=5 // pred_check
        %p743 = pneg %p742
      $region70: #{tpu_custom_call.1} parent=5 // pred_check_branch
        %745 = sbr.rel (%p743) target = $region72
      $region71: #{tpu_custom_call.1} parent=5 // pred_region
        %s746 = ssub.s32 %s22, 2
        // Predicated region
        $region73: #{tpu_custom_call.1} parent=71 // pred_check
          %p747 = pneg %p187
        $region74: #{tpu_custom_call.1} parent=71 // pred_check_branch
          %749 = sbr.rel (%p747) target = $region76
        $region75: #{tpu_custom_call.1} parent=71 // pred_region
          %s750 = sand.u32 %s172, 1
          %s751 = scalar_lea.sflag [#allocation4], %s750
          %s752 = sand.u32 %s172, 1
          %s753 = smul.addr %s752, 16
          %s754 = scalar_lea.vmem [#allocation11], %s753
          %755 = dma.done %s751, 256
        $region76: #{tpu_custom_call.1} parent=71 // pred_fallthru
          _
      $region72: #{tpu_custom_call.1} parent=5 // pred_fallthru
        _
    $region6: #{tpu_custom_call.1} parent=1 // loop_footer
      %s26 = sadd.s32 1, %s22
    $region7: #{tpu_custom_call.1} parent=1 // loop_footer_branch
      %21 = sbr.rel target = $region3
    $region8: #{tpu_custom_call.1} parent=1 // loop_exit
      _
    %756 = vsyncpa [#allocation3], 1
    %s757 = scalar_lea.sflag [#allocation3], 1
    %758 = vsyncpa %s757, 1
    %759 = vsyncpa [#allocation6], 1
    %s760 = scalar_lea.sflag [#allocation6], 1
    %761 = vsyncpa %s760, 1
    %762 = vsyncpa [#allocation9], 1
    %763 = vsyncpa [#allocation4], 1
    %s764 = scalar_lea.sflag [#allocation4], 1
    %765 = vsyncpa %s764, 1

// kernel: tpu_custom_call.1
$region0: #{tpu_custom_call.1}
  #allocation0 [shape = 'u32[]', space=smem, size = 0x4, offset = 0x4, fixed_abs, tag = 'smem constant byte address 0x4 - core index']
  #allocation1 [shape = 'u32[144,128]{1,0:T(1,128)}', space=vmem, size = 0x12000, scoped, tag = 'internal scratch']
  %s0 = inlined_call_operand.hbm [shape: s32[2,8,128], index: 0, kind: input, shape index: {}]
  %s1 = inlined_call_operand.hbm [shape: bf16[2,16,128], index: 1, kind: input, shape index: {}]
  %s2 = inlined_call_operand.hbm [shape: bf16[128,128], index: 2, kind: input, shape index: {}]
  %s3 = inlined_call_operand.hbm [shape: f32[8,128], index: 3, kind: input, shape index: {}]
  %s4 = inlined_call_operand.hbm [shape: bf16[128,128], index: 4, kind: input, shape index: {}]
  %s5 = inlined_call_operand.vmem [shape: f32[8,128], index: 5, kind: input, shape index: {}]
  %s6 = inlined_call_operand.hbm [shape: f32[2,16,128], index: 6, kind: output, shape index: {}]
  %s7 = sld [smem:[#allocation0]]
  $region77: #{tpu_custom_call.1} parent=0
    _
  %s9 = ssub.s32 1, %s7
  %s10 = scalar_select 0, %s9, %s7
  $region1: #{tpu_custom_call.1} parent=0
    #allocation2 [shape = 'u8[8192]{0}', space=vmem, size = 0x2000, scoped, tag = 'input window, operand 0']
    #allocation3 [shape = 's32[2]{0}', space=sflag, size = 0x8, scoped, tag = 'scoped memory for tpu_custom_call.1']
    #allocation4 [shape = 's32[2]{0}', space=sflag, size = 0x8, scoped, tag = 'scoped memory for tpu_custom_call.1']
    #allocation5 [shape = 'u8[8192]{0}', space=vmem, size = 0x2000, scoped, tag = 'input window, operand 1']
    #allocation6 [shape = 's32[2]{0}', space=sflag, size = 0x8, scoped, tag = 'scoped memory for tpu_custom_call.1']
    #allocation7 [shape = 'u8[32768]{0}', space=vmem, size = 0x8000, scoped, tag = 'input window, operand 2, single buffered']
    #allocation8 [shape = 'u8[4096]{0}', space=vmem, size = 0x1000, scoped, tag = 'input window, operand 3, single buffered']
    #allocation9 [shape = 's32[1]{0}', space=sflag, size = 0x4, scoped, tag = 'scoped memory for tpu_custom_call.1']
    #allocation10 [shape = 'u8[32768]{0}', space=vmem, size = 0x8000, scoped, tag = 'input window, operand 4, single buffered']
    #allocation11 [shape = 'u8[16384]{0}', space=vmem, size = 0x4000, scoped, tag = 'output window, operand 0']
    %11 = vsyncpa [#allocation3], 0
    %s12 = scalar_lea.sflag [#allocation3], 1
    %13 = vsyncpa %s12, 0
    %14 = vsyncpa [#allocation6], 0
    %s15 = scalar_lea.sflag [#allocation6], 1
    %16 = vsyncpa %s15, 0
    %17 = vsyncpa [#allocation9], 0
    %18 = vsyncpa [#allocation4], 0
    %s19 = scalar_lea.sflag [#allocation4], 1
    %20 = vsyncpa %s19, 0
    loop: start=0, step=1, limit=4
    $region2: #{tpu_custom_call.1} parent=1 // loop_pre_header
      _
    $region3: #{tpu_custom_call.1} parent=1 // loop_header
      %s22 = sphi 0, %s26
      %p23 = scmp.ge.s32.totalorder %s22, 4
      %s32 = sphi 0, %s34
      %s35 = sphi 0, %s32
      %s36 = sphi 0, %s35
      %s52 = sphi 0, %s36
      %s58 = sphi 0, %s60
      %s61 = sphi 0, %s58
      %s62 = sphi 0, %s61
      %s78 = sphi 0, %s62
      %s82 = sphi 0, %s82
      %s84 = sphi 0, %s82
      %s85 = sphi 0, %s84
      %s99 = sphi 0, %s85
      %s103 = sphi 0, %s103
      %s105 = sphi 0, %s103
      %s106 = sphi 0, %s105
      %s120 = sphi 0, %s106
      %s124 = sphi 0, %s124
      %s126 = sphi 0, %s124
      %s127 = sphi 0, %s126
      %s141 = sphi 0, %s127
      %s145 = sphi 0, %s145
      %s147 = sphi 0, %s145
      %s148 = sphi 0, %s147
      %s162 = sphi 0, %s148
      %s168 = sphi 0, %s170
      %s171 = sphi 0, %s168
      %s172 = sphi 0, %s171
      %s188 = sphi 0, %s172
    $region4: #{tpu_custom_call.1} parent=1 // loop_header_branch
      %25 = sbr.rel (%p23) target = $region8
    $region5: #{tpu_custom_call.1} parent=1 // loop_body
      %s27 = ssub.s32 %s22, 1
      %s28 = ssub.s32 %s22, 2
      %s29 = sadd.s32 %s22, 1
      %s30 = ssub.s32 %s22, %s29
      %p31 = scmp.eq.s32.totalorder %s30, 0
      %s33 = sadd.s32 %s32, 1
      %s34 = scalar_select %p31, %s32, %s33
      %p37 = pneg %p31
      %p38 = scmp.eq.s32.totalorder %s22, 1
      %p39 = por %p37, %p38
      %p40 = scmp.ne.s32.totalorder %s32, %s35
      %p41 = scmp.eq.s32.totalorder %s22, 0
      %p42 = por %p40, %p41
      %p43 = scmp.ne.s32.totalorder %s32, %s35
      %p44 = scmp.eq.s32.totalorder %s27, 1
      %p45 = por %p43, %p44
      %p46 = scmp.ne.s32.totalorder %s35, %s36
      %p47 = scmp.eq.s32.totalorder %s27, 0
      %p48 = por %p46, %p47
      %p49 = scmp.ne.s32.totalorder %s35, %s36
      %p50 = scmp.eq.s32.totalorder %s28, 1
      %p51 = por %p49, %p50
      %p53 = scmp.ne.s32.totalorder %s36, %s52
      %p54 = scmp.eq.s32.totalorder %s28, 0
      %p55 = por %p53, %p54
      %s56 = ssub.s32 %s22, %s29
      %p57 = scmp.eq.s32.totalorder %s56, 0
      %s59 = sadd.s32 %s58, 1
      %s60 = scalar_select %p57, %s58, %s59
      %p63 = pneg %p57
      %p64 = scmp.eq.s32.totalorder %s22, 1
      %p65 = por %p63, %p64
      %p66 = scmp.ne.s32.totalorder %s58, %s61
      %p67 = scmp.eq.s32.totalorder %s22, 0
      %p68 = por %p66, %p67
      %p69 = scmp.ne.s32.totalorder %s58, %s61
      %p70 = scmp.eq.s32.totalorder %s27, 1
      %p71 = por %p69, %p70
      %p72 = scmp.ne.s32.totalorder %s61, %s62
      %p73 = scmp.eq.s32.totalorder %s27, 0
      %p74 = por %p72, %p73
      %p75 = scmp.ne.s32.totalorder %s61, %s62
      %p76 = scmp.eq.s32.totalorder %s28, 1
      %p77 = por %p75, %p76
      %p79 = scmp.ne.s32.totalorder %s62, %s78
      %p80 = scmp.eq.s32.totalorder %s28, 0
      %p81 = por %p79, %p80
      %s83 = sadd.s32 %s82, 1
      %p86 = scmp.eq.s32.totalorder %s22, 1
      %p87 = scmp.ne.s32.totalorder %s82, %s84
      %p88 = scmp.eq.s32.totalorder %s22, 0
      %p89 = por %p87, %p88
      %p90 = scmp.ne.s32.totalorder %s82, %s84
      %p91 = scmp.eq.s32.totalorder %s27, 1
      %p92 = por %p90, %p91
      %p93 = scmp.ne.s32.totalorder %s84, %s85
      %p94 = scmp.eq.s32.totalorder %s27, 0
      %p95 = por %p93, %p94
      %p96 = scmp.ne.s32.totalorder %s84, %s85
      %p97 = scmp.eq.s32.totalorder %s28, 1
      %p98 = por %p96, %p97
      %p100 = scmp.ne.s32.totalorder %s85, %s99
      %p101 = scmp.eq.s32.totalorder %s28, 0
      %p102 = por %p100, %p101
      %s104 = sadd.s32 %s103, 1
      %p107 = scmp.eq.s32.totalorder %s22, 1
      %p108 = scmp.ne.s32.totalorder %s103, %s105
      %p109 = scmp.eq.s32.totalorder %s22, 0
      %p110 = por %p108, %p109
      %p111 = scmp.ne.s32.totalorder %s103, %s105
      %p112 = scmp.eq.s32.totalorder %s27, 1
      %p113 = por %p111, %p112
      %p114 = scmp.ne.s32.totalorder %s105, %s106
      %p115 = scmp.eq.s32.totalorder %s27, 0
      %p116 = por %p114, %p115
      %p117 = scmp.ne.s32.totalorder %s105, %s106
      %p118 = scmp.eq.s32.totalorder %s28, 1
      %p119 = por %p117, %p118
      %p121 = scmp.ne.s32.totalorder %s106, %s120
      %p122 = scmp.eq.s32.totalorder %s28, 0
      %p123 = por %p121, %p122
      %s125 = sadd.s32 %s124, 1
      %p128 = scmp.eq.s32.totalorder %s22, 1
      %p129 = scmp.ne.s32.totalorder %s124, %s126
      %p130 = scmp.eq.s32.totalorder %s22, 0
      %p131 = por %p129, %p130
      %p132 = scmp.ne.s32.totalorder %s124, %s126
      %p133 = scmp.eq.s32.totalorder %s27, 1
      %p134 = por %p132, %p133
      %p135 = scmp.ne.s32.totalorder %s126, %s127
      %p136 = scmp.eq.s32.totalorder %s27, 0
      %p137 = por %p135, %p136
      %p138 = scmp.ne.s32.totalorder %s126, %s127
      %p139 = scmp.eq.s32.totalorder %s28, 1
      %p140 = por %p138, %p139
      %p142 = scmp.ne.s32.totalorder %s127, %s141
      %p143 = scmp.eq.s32.totalorder %s28, 0
      %p144 = por %p142, %p143
      %s146 = sadd.s32 %s145, 1
      %p149 = scmp.eq.s32.totalorder %s22, 1
      %p150 = scmp.ne.s32.totalorder %s145, %s147
      %p151 = scmp.eq.s32.totalorder %s22, 0
      %p152 = por %p150, %p151
      %p153 = scmp.ne.s32.totalorder %s145, %s147
      %p154 = scmp.eq.s32.totalorder %s27, 1
      %p155 = por %p153, %p154
      %p156 = scmp.ne.s32.totalorder %s147, %s148
      %p157 = scmp.eq.s32.totalorder %s27, 0
      %p158 = por %p156, %p157
      %p159 = scmp.ne.s32.totalorder %s147, %s148
      %p160 = scmp.eq.s32.totalorder %s28, 1
      %p161 = por %p159, %p160
      %p163 = scmp.ne.s32.totalorder %s148, %s162
      %p164 = scmp.eq.s32.totalorder %s28, 0
      %p165 = por %p163, %p164
      %s166 = ssub.s32 %s22, %s29
      %p167 = scmp.eq.s32.totalorder %s166, 0
      %s169 = sadd.s32 %s168, 1
      %s170 = scalar_select %p167, %s168, %s169
      %p173 = pneg %p167
      %p174 = scmp.eq.s32.totalorder %s22, 1
      %p175 = por %p173, %p174
      %p176 = scmp.ne.s32.totalorder %s168, %s171
      %p177 = scmp.eq.s32.totalorder %s22, 0
      %p178 = por %p176, %p177
      %p179 = scmp.ne.s32.totalorder %s168, %s171
      %p180 = scmp.eq.s32.totalorder %s27, 1
      %p181 = por %p179, %p180
      %p182 = scmp.ne.s32.totalorder %s171, %s172
      %p183 = scmp.eq.s32.totalorder %s27, 0
      %p184 = por %p182, %p183
      %p185 = scmp.ne.s32.totalorder %s171, %s172
      %p186 = scmp.eq.s32.totalorder %s28, 1
      %p187 = por %p185, %p186
      %p189 = scmp.ne.s32.totalorder %s172, %s188
      %p190 = scmp.eq.s32.totalorder %s28, 0
      %p191 = por %p189, %p190
      %p192 = scmp.le.s32.totalorder 1, %s22
      %p193 = scmp.lt.s32.totalorder %s22, 3
      %p194 = pnand %p192, %p193
      %p195 = pneg %p194
      // Predicated region
      $region9: #{tpu_custom_call.1} parent=5 // pred_check
        _
      $region10: #{tpu_custom_call.1} parent=5 // pred_check_branch
        %197 = sbr.rel (%p194) target = $region12
      $region11: #{tpu_custom_call.1} parent=5 // pred_region
        %s198 = ssub.s32 %s22, 1
        // Predicated region
        $region13: #{tpu_custom_call.1} parent=11 // pred_check
          %p199 = pneg %p95
        $region14: #{tpu_custom_call.1} parent=11 // pred_check_branch
          %201 = sbr.rel (%p199) target = $region16
        $region15: #{tpu_custom_call.1} parent=11 // pred_region
          %s203 = ssub.s32 1024, 1024
          %204 = vsyncadd [#allocation6], %s203
          %s205 = sshll.u32 [#allocation7], 4
          %s206 = int_to_ptr.vmem [resolvable:$true] %s205
          %211 = dma.hbm_to_vmem [thread:$0]  %s2, 1024, %s206, [#allocation6], 64, 64, 4
        $region16: #{tpu_custom_call.1} parent=11 // pred_fallthru
          _
        // Predicated region
        $region17: #{tpu_custom_call.1} parent=11 // pred_check
          %p212 = pneg %p116
        $region18: #{tpu_custom_call.1} parent=11 // pred_check_branch
          %214 = sbr.rel (%p212) target = $region20
        $region19: #{tpu_custom_call.1} parent=11 // pred_region
          %s216 = ssub.s32 128, 128
          %217 = vsyncadd [#allocation9], %s216
          %s219 = sshll.u32 [#allocation8], 4
          %s220 = int_to_ptr.vmem [resolvable:$true] %s219
          %222 = dma.hbm_to_vmem [thread:$0]  %s3, 128, %s220, [#allocation9]
        $region20: #{tpu_custom_call.1} parent=11 // pred_fallthru
          _
        // Predicated region
        $region21: #{tpu_custom_call.1} parent=11 // pred_check
          %p223 = pneg %p137
        $region22: #{tpu_custom_call.1} parent=11 // pred_check_branch
          %225 = sbr.rel (%p223) target = $region24
        $region23: #{tpu_custom_call.1} parent=11 // pred_region
          %s227 = ssub.s32 1024, 1024
          %228 = vsyncadd [#allocation9], %s227
          %s229 = sshll.u32 [#allocation10], 4
          %s230 = int_to_ptr.vmem [resolvable:$true] %s229
          %235 = dma.hbm_to_vmem [thread:$0]  %s4, 1024, %s230, [#allocation9], 64, 64, 4
        $region24: #{tpu_custom_call.1} parent=11 // pred_fallthru
          _
        // Predicated region
        $region25: #{tpu_custom_call.1} parent=11 // pred_check
          %p236 = pneg %p158
        $region26: #{tpu_custom_call.1} parent=11 // pred_check_branch
          %238 = sbr.rel (%p236) target = $region28
        $region27: #{tpu_custom_call.1} parent=11 // pred_region
          _
        $region28: #{tpu_custom_call.1} parent=11 // pred_fallthru
          _
      $region12: #{tpu_custom_call.1} parent=5 // pred_fallthru
        _
      %p239 = scmp.lt.s32.totalorder %s22, 2
      // Predicated region
      $region29: #{tpu_custom_call.1} parent=5 // pred_check
        %p240 = pneg %p239
      $region30: #{tpu_custom_call.1} parent=5 // pred_check_branch
        %242 = sbr.rel (%p240) target = $region32
      $region31: #{tpu_custom_call.1} parent=5 // pred_region
        // Predicated region
        $region33: #{tpu_custom_call.1} parent=31 // pred_check
          %p243 = pneg %p42
        $region34: #{tpu_custom_call.1} parent=31 // pred_check_branch
          %245 = sbr.rel (%p243) target = $region36
        $region35: #{tpu_custom_call.1} parent=31 // pred_region
          %s246 = sand.u32 %s32, 1
          %s247 = scalar_lea.sflag [#allocation3], %s246
          %s248 = sand.u32 %s32, 1
          %s249 = smul.addr %s248, 8
          %s250 = scalar_lea.vmem [#allocation2], %s249
          %s252 = ssub.s32 128, 128
          %253 = vsyncadd %s247, %s252
          %s254 = smul.addr %s22, 128
          %s255 = scalar_lea.hbm %s0, %s254
          %s257 = sshll.u32 %s250, 4
          %s258 = int_to_ptr.vmem [resolvable:$true] %s257
          %260 = dma.hbm_to_vmem [thread:$0]  %s255, 128, %s258, %s247
        $region36: #{tpu_custom_call.1} parent=31 // pred_fallthru
          _
        // Predicated region
        $region37: #{tpu_custom_call.1} parent=31 // pred_check
          %p261 = pneg %p68
        $region38: #{tpu_custom_call.1} parent=31 // pred_check_branch
          %263 = sbr.rel (%p261) target = $region40
        $region39: #{tpu_custom_call.1} parent=31 // pred_region
          %s264 = sand.u32 %s22, 1
          %s265 = scalar_lea.sflag [#allocation6], %s264
          %s266 = sand.u32 %s58, 1
          %s267 = smul.addr %s266, 8
          %s268 = scalar_lea.vmem [#allocation5], %s267
          %s270 = ssub.s32 128, 128
          %271 = vsyncadd %s265, %s270
          %s272 = smul.addr %s22, 2
          %s273 = smul.addr %s272, 64
          %s274 = scalar_lea.hbm %s1, %s273
          %s275 = sshll.u32 %s268, 4
          %s276 = int_to_ptr.vmem [resolvable:$true] %s275
          %281 = dma.hbm_to_vmem [thread:$0]  %s274, 128, %s276, %s265, 64, 64, 4
        $region40: #{tpu_custom_call.1} parent=31 // pred_fallthru
          _
      $region32: #{tpu_custom_call.1} parent=5 // pred_fallthru
        _
      %p282 = scmp.le.s32.totalorder 1, %s22
      %p283 = scmp.lt.s32.totalorder %s22, 3
      %p284 = pnand %p282, %p283
      %p285 = pneg %p284
      // Predicated region
      $region41: #{tpu_custom_call.1} parent=5 // pred_check
        _
      $region42: #{tpu_custom_call.1} parent=5 // pred_check_branch
        %287 = sbr.rel (%p284) target = $region44
      $region43: #{tpu_custom_call.1} parent=5 // pred_region
        %s288 = ssub.s32 %s22, 1
        %s289 = sand.u32 %s35, 1
        %s290 = scalar_lea.sflag [#allocation3], %s289
        %s291 = sand.u32 %s35, 1
        %s292 = smul.addr %s291, 8
        %s293 = scalar_lea.vmem [#allocation2], %s292
        // Predicated region
        $region45: #{tpu_custom_call.1} parent=43 // pred_check
          %p294 = pneg %p48
        $region46: #{tpu_custom_call.1} parent=43 // pred_check_branch
          %296 = sbr.rel (%p294) target = $region48
        $region47: #{tpu_custom_call.1} parent=43 // pred_region
          %297 = dma.done %s290, 128
        $region48: #{tpu_custom_call.1} parent=43 // pred_fallthru
          _
        %s298 = sand.u32 %s27, 1
        %s299 = scalar_lea.sflag [#allocation6], %s298
        %s300 = sand.u32 %s61, 1
        %s301 = smul.addr %s300, 8
        %s302 = scalar_lea.vmem [#allocation5], %s301
        // Predicated region
        $region49: #{tpu_custom_call.1} parent=43 // pred_check
          %p303 = pneg %p74
        $region50: #{tpu_custom_call.1} parent=43 // pred_check_branch
          %305 = sbr.rel (%p303) target = $region52
        $region51: #{tpu_custom_call.1} parent=43 // pred_region
          %306 = dma.done %s299, 128
        $region52: #{tpu_custom_call.1} parent=43 // pred_fallthru
          _
        // Predicated region
        $region53: #{tpu_custom_call.1} parent=43 // pred_check
          %p307 = pneg %p95
        $region54: #{tpu_custom_call.1} parent=43 // pred_check_branch
          %309 = sbr.rel (%p307) target = $region56
        $region55: #{tpu_custom_call.1} parent=43 // pred_region
          %310 = dma.done [#allocation6], 1024
        $region56: #{tpu_custom_call.1} parent=43 // pred_fallthru
          _
        // Predicated region
        $region57: #{tpu_custom_call.1} parent=43 // pred_check
          %p311 = pneg %p116
        $region58: #{tpu_custom_call.1} parent=43 // pred_check_branch
          %313 = sbr.rel (%p311) target = $region60
        $region59: #{tpu_custom_call.1} parent=43 // pred_region
          %314 = dma.done [#allocation9], 128
        $region60: #{tpu_custom_call.1} parent=43 // pred_fallthru
          _
        // Predicated region
        $region61: #{tpu_custom_call.1} parent=43 // pred_check
          %p315 = pneg %p137
        $region62: #{tpu_custom_call.1} parent=43 // pred_check_branch
          %317 = sbr.rel (%p315) target = $region64
        $region63: #{tpu_custom_call.1} parent=43 // pred_region
          %318 = dma.done [#allocation9], 1024
        $region64: #{tpu_custom_call.1} parent=43 // pred_fallthru
          _
        %s319 = sand.u32 %s35, 1
        %s320 = scalar_lea.sflag [#allocation3], %s319
        %s321 = sand.u32 %s35, 1
        %s322 = smul.addr %s321, 8
        %s323 = scalar_lea.vmem [#allocation2], %s322
        %p324 = pneg %p48
        %p325 = pneg %p45
        %s326 = sand.u32 %s27, 1
        %s327 = scalar_lea.sflag [#allocation6], %s326
        %s328 = sand.u32 %s61, 1
        %s329 = smul.addr %s328, 8
        %s330 = scalar_lea.vmem [#allocation5], %s329
        %p331 = pneg %p74
        %p332 = pneg %p71
        %p333 = pneg %p95
        %p334 = pneg %p92
        %p335 = pneg %p116
        %p336 = pneg %p113
        %p337 = pneg %p137
        %p338 = pneg %p134
        %p339 = pneg %p158
        %p340 = pneg %p155
        %p341 = pneg %p184
        %p342 = pneg %p181
        %s343 = sand.u32 %s171, 1
        %s344 = scalar_lea.sflag [#allocation4], %s343
        %s345 = sand.u32 %s171, 1
        %s346 = smul.addr %s345, 16
        %s347 = scalar_lea.vmem [#allocation11], %s346
        %v349 = vld [vmem:[%s293] sm:$0xff]
        %vm350 = vcmp.gt.s32.totalorder %v349, 1
        %v351 = vsel %vm350, %v349, 1
        %v352 = vcvt.s32.f32 %v351
        %v353 = vrcp.pop %v352
        %v354 = vmul.f32 1.0, %v353
        %v355 = vlaneseq
        %v356 = vshrl.u32 %v355, 7
        %v357 = vadd.s32 %v356, 8
        %v358 = vlaneseq
        %v359 = vshrl.u32 %v358, 7
        %v360 = vsub.s32 0, %v359
        %v361 = vrot.slane %v349, %v360
        %vm362 = vcmp.lt.s32.totalorder %v356, %v361
        %vm363 = vcmp.lt.s32.totalorder %v357, %v361
        %v364 = vsel %vm362, 1, 0
        %v365 = vsel %vm363, 1, 0
        %v366 = vcvt.s32.f32 %v364
        %v367 = vcvt.s32.f32 %v365
        %v368 = vld [vmem:[#allocation8] sm:$0xff]
        %v369 = vld [vmem:[%s5] sm:$0xff]
        %v370 = vld [vmem:[%s302] sm:$0xf]
        %v371 = vld [vmem:[%s302 + $0x4] sm:$0xf]
        %v372 = vld [vmem:[#allocation7] sm:$0xf]
        %v373 = vld [vmem:[#allocation7 + $0x4] sm:$0xf]
        %v374 = vld [vmem:[#allocation7 + $0x8] sm:$0xf]
        %v375 = vld [vmem:[#allocation7 + $0xc] sm:$0xf]
        %v376 = vld [vmem:[#allocation7 + $0x10] sm:$0xf]
        %v377 = vld [vmem:[#allocation7 + $0x14] sm:$0xf]
        %v378 = vld [vmem:[#allocation7 + $0x18] sm:$0xf]
        %v379 = vld [vmem:[#allocation7 + $0x1c] sm:$0xf]
        %v380 = vld [vmem:[#allocation7 + $0x20] sm:$0xf]
        %v381 = vld [vmem:[#allocation7 + $0x24] sm:$0xf]
        %v382 = vld [vmem:[#allocation7 + $0x28] sm:$0xf]
        %v383 = vld [vmem:[#allocation7 + $0x2c] sm:$0xf]
        %v384 = vld [vmem:[#allocation7 + $0x30] sm:$0xf]
        %v385 = vld [vmem:[#allocation7 + $0x34] sm:$0xf]
        %v386 = vld [vmem:[#allocation7 + $0x38] sm:$0xf]
        %v387 = vld [vmem:[#allocation7 + $0x3c] sm:$0xf]
        %v390 = vunpack.c.l.b16 %v370
        %v391 = vunpack.c.l.b16 %v371
        %v392 = vpack.c.b16 %v391, %v390
        %v410 = vunpack.c.l.b16 %v372
        %v411 = vunpack.c.l.b16 %v373
        %v412 = vunpack.c.l.b16 %v374
        %v413 = vunpack.c.l.b16 %v375
        %v414 = vunpack.c.l.b16 %v376
        %v415 = vunpack.c.l.b16 %v377
        %v416 = vunpack.c.l.b16 %v378
        %v417 = vunpack.c.l.b16 %v379
        %v418 = vunpack.c.l.b16 %v380
        %v419 = vunpack.c.l.b16 %v381
        %v420 = vunpack.c.l.b16 %v382
        %v421 = vunpack.c.l.b16 %v383
        %v422 = vunpack.c.l.b16 %v384
        %v423 = vunpack.c.l.b16 %v385
        %v424 = vunpack.c.l.b16 %v386
        %v425 = vunpack.c.l.b16 %v387
        %v426 = vpack.c.b16 %v411, %v410
        %v427 = vpack.c.b16 %v413, %v412
        %v428 = vpack.c.b16 %v415, %v414
        %v429 = vpack.c.b16 %v417, %v416
        %v430 = vpack.c.b16 %v419, %v418
        %v431 = vpack.c.b16 %v421, %v420
        %v432 = vpack.c.b16 %v423, %v422
        %v433 = vpack.c.b16 %v425, %v424
        %442 = vmatprep.subr.bf16.mxu0 0
        %443 = vmatpush1.bf16.msra.mxu0 %v433
        %444 = vmatprep.subr.bf16.mxu0 0
        %445 = vmatpush1.bf16.msra.mxu0 %v432
        %446 = vmatprep.subr.bf16.mxu0 0
        %447 = vmatpush1.bf16.msra.mxu0 %v431
        %448 = vmatprep.subr.bf16.mxu0 0
        %449 = vmatpush1.bf16.msra.mxu0 %v430
        %450 = vmatprep.subr.bf16.mxu0 0
        %451 = vmatpush1.bf16.msra.mxu0 %v429
        %452 = vmatprep.subr.bf16.mxu0 0
        %453 = vmatpush1.bf16.msra.mxu0 %v428
        %454 = vmatprep.subr.bf16.mxu0 0
        %455 = vmatpush1.bf16.msra.mxu0 %v427
        %456 = vmatprep.subr.bf16.mxu0 0
        %457 = vmatpush1.bf16.msra.mxu0 %v426
        %458 = vmatprep.subr.bf16.mxu0 0
        %459 = vmatpush2.bf16.msra.mxu0 0
        %460 = vmatprep.subr.bf16.mxu0 0
        %461 = vmatpush2.bf16.msra.mxu0 0
        %462 = vmatprep.subr.bf16.mxu0 0
        %463 = vmatpush2.bf16.msra.mxu0 0
        %464 = vmatprep.subr.bf16.mxu0 0
        %465 = vmatpush2.bf16.msra.mxu0 0
        %466 = vmatprep.subr.bf16.mxu0 0
        %467 = vmatpush2.bf16.msra.mxu0 0
        %468 = vmatprep.subr.bf16.mxu0 0
        %469 = vmatpush2.bf16.msra.mxu0 0
        %470 = vmatprep.subr.bf16.mxu0 0
        %471 = vmatpush2.bf16.msra.mxu0 0
        %472 = vmatprep.subr.bf16.mxu0 0
        %473 = vmatpush2.bf16.msra.mxu0 0
        %474 = vmatprep.mubr.bf16.mxu0 0
        %475 = vmatmul.mubr.bf16.gmra.mxu0 %v392
        %v476 = vpop.f32.mrf.mxu0
        %v477 = vadd.f32 0.0, %v476
        %v478 = vpop.f32.mrf.mxu0
        %v479 = vpop.f32.mrf.mxu0
        %v480 = vadd.f32 0.0, %v479
        %v481 = vpop.f32.mrf.mxu0
        %482 = vdwg.mxu0
        %v483 = vadd.f32 %v477, %v480
        %v484 = vrot.slane %v483, 4
        %v485 = vadd.f32 %v483, %v484
        %v486 = vrot.slane %v485, 2
        %v487 = vadd.f32 %v485, %v486
        %v488 = vrot.slane %v487, 1
        %v489 = vadd.f32 %v487, %v488
        %491 = vset.pattern.permute.xlu0 0
        %492 = vperm.xlu0 %491, %v354
        %v493 = vpop.permute.xlu0 %492
        %v495 = vmul.f32 %v489, %v493
        %v496 = vadd.f32 %v495, %v368
        %v497 = vlaneseq
        %v498 = vshrl.u32 %v497, 7
        %v499 = vsub.s32 0, %v498
        %v500 = vrot.slane %v368, %v499
        %v501 = vadd.f32 %v477, %v500
        %v502 = vadd.f32 %v480, %v500
        %v504 = vrot.slane %v368, 3
        %v506 = vmul.f32 %v496, %v504
        %v507 = vlaneseq
        %v508 = vshrl.u32 %v507, 7
        %v509 = vsub.s32 0, %v508
        %v510 = vrot.slane %v506, %v509
        %v511 = vsub.f32 %v501, %v510
        %v512 = vsub.f32 %v502, %v510
        %514 = vset.pattern.permute.xlu0 0
        %515 = vperm.xlu0 %514, %v366
        %v516 = vpop.permute.xlu0 %515
        %519 = vset.pattern.permute.xlu0 0
        %520 = vperm.xlu0 %519, %v367
        %v521 = vpop.permute.xlu0 %520
        %v523 = vmul.f32 %v511, %v516
        %v524 = vmul.f32 %v512, %v521
        %v525 = vmul.f32 %v523, %v523
        %v526 = vmul.f32 %v524, %v524
        %v527 = vadd.f32 %v525, %v526
        %v528 = vrot.slane %v527, 4
        %v529 = vadd.f32 %v527, %v528
        %v530 = vrot.slane %v529, 2
        %v531 = vadd.f32 %v529, %v530
        %v532 = vrot.slane %v531, 1
        %v533 = vadd.f32 %v531, %v532
        %v534 = vmul.f32 %v533, %v493
        %v535 = vadd.f32 %v534, 1e-06
        %v536 = vrsqrt.pop %v535
        %v538 = vrot.slane %v536, 7
        %v540 = vmul.f32 %v368, %v538
        %v541 = vlaneseq
        %v542 = vshrl.u32 %v541, 7
        %v543 = vsub.s32 1, %v542
        %v544 = vrot.slane %v540, %v543
        %v545 = vmul.f32 %v511, %v544
        %v546 = vmul.f32 %v512, %v544
        %v547 = vlaneseq
        %v548 = vshrl.u32 %v547, 7
        %v549 = vsub.s32 2, %v548
        %v550 = vrot.slane %v368, %v549
        %v551 = vadd.f32 %v545, %v550
        %v552 = vadd.f32 %v546, %v550
        %v553 = vmax.f32 %v551, 0.0
        %v554 = vmax.f32 %v552, 0.0
        %v555 = vpack.c.bf16 %v554, %v553
        %v556 = vld [vmem:[#allocation10] sm:$0xf]
        %v557 = vld [vmem:[#allocation10 + $0x4] sm:$0xf]
        %v558 = vld [vmem:[#allocation10 + $0x8] sm:$0xf]
        %v559 = vld [vmem:[#allocation10 + $0xc] sm:$0xf]
        %v560 = vld [vmem:[#allocation10 + $0x10] sm:$0xf]
        %v561 = vld [vmem:[#allocation10 + $0x14] sm:$0xf]
        %v562 = vld [vmem:[#allocation10 + $0x18] sm:$0xf]
        %v563 = vld [vmem:[#allocation10 + $0x1c] sm:$0xf]
        %v564 = vld [vmem:[#allocation10 + $0x20] sm:$0xf]
        %v565 = vld [vmem:[#allocation10 + $0x24] sm:$0xf]
        %v566 = vld [vmem:[#allocation10 + $0x28] sm:$0xf]
        %v567 = vld [vmem:[#allocation10 + $0x2c] sm:$0xf]
        %v568 = vld [vmem:[#allocation10 + $0x30] sm:$0xf]
        %v569 = vld [vmem:[#allocation10 + $0x34] sm:$0xf]
        %v570 = vld [vmem:[#allocation10 + $0x38] sm:$0xf]
        %v571 = vld [vmem:[#allocation10 + $0x3c] sm:$0xf]
        %v588 = vunpack.c.l.b16 %v556
        %v589 = vunpack.c.l.b16 %v557
        %v590 = vunpack.c.l.b16 %v558
        %v591 = vunpack.c.l.b16 %v559
        %v592 = vunpack.c.l.b16 %v560
        %v593 = vunpack.c.l.b16 %v561
        %v594 = vunpack.c.l.b16 %v562
        %v595 = vunpack.c.l.b16 %v563
        %v596 = vunpack.c.l.b16 %v564
        %v597 = vunpack.c.l.b16 %v565
        %v598 = vunpack.c.l.b16 %v566
        %v599 = vunpack.c.l.b16 %v567
        %v600 = vunpack.c.l.b16 %v568
        %v601 = vunpack.c.l.b16 %v569
        %v602 = vunpack.c.l.b16 %v570
        %v603 = vunpack.c.l.b16 %v571
        %v604 = vpack.c.b16 %v589, %v588
        %v605 = vpack.c.b16 %v591, %v590
        %v606 = vpack.c.b16 %v593, %v592
        %v607 = vpack.c.b16 %v595, %v594
        %v608 = vpack.c.b16 %v597, %v596
        %v609 = vpack.c.b16 %v599, %v598
        %v610 = vpack.c.b16 %v601, %v600
        %v611 = vpack.c.b16 %v603, %v602
        %620 = vmatprep.subr.bf16.mxu0 0
        %621 = vmatpush1.bf16.msra.mxu0 %v611
        %622 = vmatprep.subr.bf16.mxu0 0
        %623 = vmatpush1.bf16.msra.mxu0 %v610
        %624 = vmatprep.subr.bf16.mxu0 0
        %625 = vmatpush1.bf16.msra.mxu0 %v609
        %626 = vmatprep.subr.bf16.mxu0 0
        %627 = vmatpush1.bf16.msra.mxu0 %v608
        %628 = vmatprep.subr.bf16.mxu0 0
        %629 = vmatpush1.bf16.msra.mxu0 %v607
        %630 = vmatprep.subr.bf16.mxu0 0
        %631 = vmatpush1.bf16.msra.mxu0 %v606
        %632 = vmatprep.subr.bf16.mxu0 0
        %633 = vmatpush1.bf16.msra.mxu0 %v605
        %634 = vmatprep.subr.bf16.mxu0 0
        %635 = vmatpush1.bf16.msra.mxu0 %v604
        %636 = vmatprep.subr.bf16.mxu0 0
        %637 = vmatpush2.bf16.msra.mxu0 0
        %638 = vmatprep.subr.bf16.mxu0 0
        %639 = vmatpush2.bf16.msra.mxu0 0
        %640 = vmatprep.subr.bf16.mxu0 0
        %641 = vmatpush2.bf16.msra.mxu0 0
        %642 = vmatprep.subr.bf16.mxu0 0
        %643 = vmatpush2.bf16.msra.mxu0 0
        %644 = vmatprep.subr.bf16.mxu0 0
        %645 = vmatpush2.bf16.msra.mxu0 0
        %646 = vmatprep.subr.bf16.mxu0 0
        %647 = vmatpush2.bf16.msra.mxu0 0
        %648 = vmatprep.subr.bf16.mxu0 0
        %649 = vmatpush2.bf16.msra.mxu0 0
        %650 = vmatprep.subr.bf16.mxu0 0
        %651 = vmatpush2.bf16.msra.mxu0 0
        %652 = vmatprep.mubr.bf16.mxu0 0
        %653 = vmatmul.mubr.bf16.gmra.mxu0 %v555
        %v654 = vpop.f32.mrf.mxu0
        %v655 = vadd.f32 0.0, %v654
        %v656 = vpop.f32.mrf.mxu0
        %v657 = vpop.f32.mrf.mxu0
        %v658 = vadd.f32 0.0, %v657
        %v659 = vpop.f32.mrf.mxu0
        %660 = vdwg.mxu0
        %v661 = vlaneseq
        %v662 = vshrl.u32 %v661, 7
        %v663 = vsub.s32 0, %v662
        %v664 = vrot.slane %v369, %v663
        %v665 = vadd.f32 %v655, %v664
        %v666 = vadd.f32 %v658, %v664
        %v667 = vmul.f32 %v665, %v516
        %v668 = vmul.f32 %v666, %v521
        %v669 = vadd.f32 %v667, %v668
        %v670 = vrot.slane %v669, 4
        %v671 = vadd.f32 %v669, %v670
        %v672 = vrot.slane %v671, 2
        %v673 = vadd.f32 %v671, %v672
        %v674 = vrot.slane %v673, 1
        %v675 = vadd.f32 %v673, %v674
        %v676 = vmul.f32 %v675, %v493
        %v678 = vrot.slane %v369, 3
        %v680 = vmul.f32 %v676, %v678
        %v681 = vlaneseq
        %v682 = vshrl.u32 %v681, 7
        %v683 = vsub.s32 0, %v682
        %v684 = vrot.slane %v680, %v683
        %v685 = vsub.f32 %v665, %v684
        %v686 = vsub.f32 %v666, %v684
        %v687 = vmul.f32 %v685, %v516
        %v688 = vmul.f32 %v686, %v521
        %v689 = vmul.f32 %v687, %v687
        %v690 = vmul.f32 %v688, %v688
        %v691 = vadd.f32 %v689, %v690
        %v692 = vrot.slane %v691, 4
        %v693 = vadd.f32 %v691, %v692
        %v694 = vrot.slane %v693, 2
        %v695 = vadd.f32 %v693, %v694
        %v696 = vrot.slane %v695, 1
        %v697 = vadd.f32 %v695, %v696
        %v698 = vmul.f32 %v697, %v493
        %v699 = vadd.f32 %v698, 1e-06
        %v700 = vrsqrt.pop %v699
        %v702 = vrot.slane %v700, 7
        %v704 = vmul.f32 %v369, %v702
        %v705 = vlaneseq
        %v706 = vshrl.u32 %v705, 7
        %v707 = vsub.s32 1, %v706
        %v708 = vrot.slane %v704, %v707
        %v709 = vmul.f32 %v685, %v708
        %v710 = vmul.f32 %v686, %v708
        %v711 = vlaneseq
        %v712 = vshrl.u32 %v711, 7
        %v713 = vsub.s32 2, %v712
        %v714 = vrot.slane %v369, %v713
        %v715 = vadd.f32 %v709, %v714
        %v716 = vadd.f32 %v710, %v714
        %v717 = vmax.f32 %v715, 0.0
        %v718 = vmax.f32 %v716, 0.0
        %719 = vst [vmem:[%s347] sm:$0xff] %v717
        %720 = vst [vmem:[%s347 + $0x8] sm:$0xff] %v718
        %s721 = sand.u32 %s171, 1
        %s722 = scalar_lea.sflag [#allocation4], %s721
        %s723 = sand.u32 %s171, 1
        %s724 = smul.addr %s723, 16
        %s725 = scalar_lea.vmem [#allocation11], %s724
        // Predicated region
        $region65: #{tpu_custom_call.1} parent=43 // pred_check
          %p726 = pneg %p181
        $region66: #{tpu_custom_call.1} parent=43 // pred_check_branch
          %728 = sbr.rel (%p726) target = $region68
        $region67: #{tpu_custom_call.1} parent=43 // pred_region
          %s730 = ssub.s32 256, 256
          %731 = vsyncadd %s722, %s730
          %s732 = smul.addr %s27, 2
          %s733 = smul.addr %s732, 128
          %s734 = scalar_lea.hbm %s6, %s733
          %s735 = sshll.u32 %s725, 4
          %s736 = int_to_ptr.vmem [resolvable:$true] %s735
          %741 = dma.vmem_to_hbm [thread:$0]  %s736, 256, %s734, %s722, 128, 128, 8
        $region68: #{tpu_custom_call.1} parent=43 // pred_fallthru
          _
      $region44: #{tpu_custom_call.1} parent=5 // pred_fallthru
        _
      %p742 = scmp.le.s32.totalorder 2, %s22
      // Predicated region
      $region69: #{tpu_custom_call.1} parent=5 // pred_check
        %p743 = pneg %p742
      $region70: #{tpu_custom_call.1} parent=5 // pred_check_branch
        %745 = sbr.rel (%p743) target = $region72
      $region71: #{tpu_custom_call.1} parent=5 // pred_region
        %s746 = ssub.s32 %s22, 2
        // Predicated region
        $region73: #{tpu_custom_call.1} parent=71 // pred_check
          %p747 = pneg %p187
        $region74: #{tpu_custom_call.1} parent=71 // pred_check_branch
          %749 = sbr.rel (%p747) target = $region76
        $region75: #{tpu_custom_call.1} parent=71 // pred_region
          %s750 = sand.u32 %s172, 1
          %s751 = scalar_lea.sflag [#allocation4], %s750
          %s752 = sand.u32 %s172, 1
          %s753 = smul.addr %s752, 16
          %s754 = scalar_lea.vmem [#allocation11], %s753
          %755 = dma.done %s751, 256
        $region76: #{tpu_custom_call.1} parent=71 // pred_fallthru
          _
      $region72: #{tpu_custom_call.1} parent=5 // pred_fallthru
        _
    $region6: #{tpu_custom_call.1} parent=1 // loop_footer
      %s26 = sadd.s32 1, %s22
    $region7: #{tpu_custom_call.1} parent=1 // loop_footer_branch
      %21 = sbr.rel target = $region3
    $region8: #{tpu_custom_call.1} parent=1 // loop_exit
      _
    %756 = vsyncpa [#allocation3], 1
    %s757 = scalar_lea.sflag [#allocation3], 1
    %758 = vsyncpa %s757, 1
    %759 = vsyncpa [#allocation6], 1
    %s760 = scalar_lea.sflag [#allocation6], 1
    %761 = vsyncpa %s760, 1
    %762 = vsyncpa [#allocation9], 1
    %763 = vsyncpa [#allocation4], 1
    %s764 = scalar_lea.sflag [#allocation4], 1
    %765 = vsyncpa %s764, 1

</llo_original>
